<compile_context>
chip_gen: v7x
topology: tpu7x:2x2x1
jax: 0.10.0
libtpu: 0.0.40
codegen_flags: <defaults>
</compile_context>

<pallas_src>
import jax
import jax.numpy as jnp
from jax.experimental import pallas as pl
from jax.experimental.pallas import tpu as pltpu

# Model hyper-parameters (small, consistent with the PyTorch module __init__).
NUM_LAYERS = 2          # num_layers (kernel is specialized for 2 layers)
HIDDEN = 32             # hidden_dim
CODE_DIM = 8            # code_dim  (== sequence length of x)
VQ_VOCAB = 128          # vq_num_vocabs
BATCH = 8

# Row layout of the packed weight slab (all sections 8-row aligned, 256 lanes).
ROW_WIH0 = 0                              # (H, 8H)  layer-0 input weights, interleaved cols
ROW_BIAS = ROW_WIH0 + HIDDEN              # (1, 8H)  b0 at layer-0 lanes, b1 at layer-1 lanes
ROW_WBLK = ROW_BIAS + 8                   # (2H, 8H) wavefront weights [[Whh0,Wih1],[0,Whh1]]
ROW_WDEC = ROW_WBLK + 2 * HIDDEN          # (2H, V)  decoder weights (top H rows zero)
ROW_BDEC = ROW_WDEC + 2 * HIDDEN          # (1, V)   decoder bias
SLAB_ROWS = ROW_BDEC + 8                  # = 176


def plug_lstm_kernel(xin_ref, slab_ref, out_ref, xb_ref, htop_ref):
    """Whole teacher-forced decode (all T timesteps) in one kernel invocation.

    xin_ref  : ((T+1)*B, H)  embedding(trg_t) + y_encoded, time-major; last block zeros
    slab_ref : (176, 256)    packed weights (see ROW_* layout above)
    out_ref  : (T*B, V)      logits, time-major flattened
    xb_ref   : ((T+1)*B, 8H) VMEM scratch: hoisted input projection + biases
    htop_ref : (T*B, 2H)     VMEM scratch: packed [h0|h1] per step (decoder uses h1 half)
    """
    T, B, H, V = CODE_DIM, BATCH, HIDDEN, VQ_VOCAB
    G = 8 * H   # 256 gate lanes per wave: [i0 i1 f0 f1 g0 g1 o0 o1]

    # --- Hoisted input projection for ALL waves at once (off the critical chain).
    # Layer-0 x-contribution lands on the layer-0 gate lanes, zeros elsewhere;
    # both layers' biases are folded in, so the wave loop does a single add.
    w_ih0 = slab_ref[ROW_WIH0:ROW_WIH0 + H, :]                     # (H, 8H)
    bias = slab_ref[ROW_BIAS:ROW_BIAS + 1, :]                      # (1, 8H)
    xb_ref[...] = (jnp.dot(xin_ref[...], w_ih0,
                           preferred_element_type=jnp.float32) + bias)

    # Wavefront weight block, hoisted once (RHS of every wave matmul).
    w_blk = slab_ref[ROW_WBLK:ROW_WBLK + 2 * H, :]                 # (2H, 8H)

    def cell(gates, c01):
        # Full-width nonlinearities on the (B, 8H) block, then 64-lane slices.
        # Packed layout keeps [layer0|layer1] adjacent, so the new packed
        # hidden/cell state falls out with no concatenate.
        s = jax.nn.sigmoid(gates)
        th = jnp.tanh(gates)
        i01 = s[:, 0 * H:2 * H]
        f01 = s[:, 2 * H:4 * H]
        g01 = th[:, 4 * H:6 * H]
        o01 = s[:, 6 * H:8 * H]
        c_new = f01 * c01 + i01 * g01
        h_new = o01 * jnp.tanh(c_new)
        return h_new, c_new

    # --- Wave 0: layer-0 step 0 only. Recurrent state is all zeros, so the
    # gates are just the hoisted projection row block (no matmul needed).
    gates = xb_ref[0:B, :]
    s0 = jax.nn.sigmoid(gates)
    th0 = jnp.tanh(gates)
    # keep only the layer-0 half of the packed cell state (layer-1 step -1 = 0)
    mask0 = (jax.lax.broadcasted_iota(jnp.int32, (B, 2 * H), 1) < H
             ).astype(jnp.float32)
    c01 = mask0 * (s0[:, 0:2 * H] * th0[:, 4 * H:6 * H])           # f*c_prev = 0
    h01 = s0[:, 6 * H:8 * H] * jnp.tanh(c01)                       # layer-1 lanes -> 0

    # --- Waves 1..T: one fused (B, 2H) @ (2H, 8H) matmul per wave on the
    # critical path computes layer-0 gates of step w and layer-1 gates of
    # step w-1 together.
    for w in range(1, T + 1):   # static, fully unrolled (T is tiny)
        gates = (jnp.dot(h01, w_blk, preferred_element_type=jnp.float32)
                 + xb_ref[w * B:(w + 1) * B, :])
        h01, c01 = cell(gates, c01)
        # Commit the top-layer hidden state of step w-1 (packed; decoder
        # weight rows for the layer-0 half are zero, so no lane extraction).
        htop_ref[(w - 1) * B:w * B, :] = h01
        # Note: at the final wave (w == T) the layer-0 half of h01/c01 belongs
        # to a nonexistent step T; it is never read again, so no masking needed.

    # --- Batched decoder: one (T*B, 2H) @ (2H, V) matmul, lane-dense (64,128) store.
    w_dec = slab_ref[ROW_WDEC:ROW_WDEC + 2 * H, 0:V]               # (2H, V)
    b_dec = slab_ref[ROW_BDEC:ROW_BDEC + 1, 0:V]                   # (1, V)
    out_ref[...] = (jnp.dot(htop_ref[...], w_dec,
                            preferred_element_type=jnp.float32) + b_dec)


def _interleave_gate_cols(a0, a1):
    """Place layer-0 / layer-1 gate columns (PyTorch order i,f,g,o) at
    interleaved lane blocks [i0 i1 f0 f1 g0 g1 o0 o1]."""
    H = HIDDEN
    blocks = []
    for k in range(4):
        blocks.append(a0[..., k * H:(k + 1) * H])
        blocks.append(a1[..., k * H:(k + 1) * H])
    return jnp.concatenate(blocks, axis=-1)


def _pack_weight_slab(params):
    """Pack every kernel weight into one (176, 256) f32 slab (one DMA)."""
    H, V = HIDDEN, VQ_VOCAB
    zeros_h = jnp.zeros((H, 4 * H), jnp.float32)
    w_ih0p = _interleave_gate_cols(params["w_ih"][0], zeros_h)          # (H, 8H)
    bias_pack = _interleave_gate_cols(params["b_gates"][0],
                                      params["b_gates"][1])             # (1, 8H)
    w_blk = jnp.concatenate([
        _interleave_gate_cols(params["w_hh"][0], params["w_ih"][1]),    # from h0_prev
        _interleave_gate_cols(zeros_h, params["w_hh"][1]),              # from h1_prev
    ], axis=0)                                                          # (2H, 8H)

    slab = jnp.zeros((SLAB_ROWS, 8 * H), jnp.float32)
    slab = slab.at[ROW_WIH0:ROW_WIH0 + H].set(w_ih0p)
    slab = slab.at[ROW_BIAS].set(bias_pack[0])
    slab = slab.at[ROW_WBLK:ROW_WBLK + 2 * H].set(w_blk)
    # decoder: rows [ROW_WDEC, ROW_WDEC+H) stay zero (layer-0 half of packed h)
    slab = slab.at[ROW_WDEC + H:ROW_WDEC + 2 * H, 0:V].set(params["w_dec"])
    slab = slab.at[ROW_BDEC, 0:V].set(params["b_dec"][0])
    return slab


def plug_lstm_forward(params, x, y):
    """Equivalent of PlugLSTM.forward(x, y, teacher_forcing_ratio=1.0).

    x: (B, CODE_DIM) int32 token indices in [0, VQ_VOCAB)
    y: (B,) float32
    returns logits: (B, CODE_DIM, VQ_VOCAB) float32
    """
    B, T = x.shape
    assert B == BATCH and T == CODE_DIM and NUM_LAYERS == 2

    emb = params["embedding"]                                     # (V+1, H)
    # y_encoder = Linear(1, hidden_dim) applied to y.unsqueeze(1)
    y_enc = y[:, None] * params["w_y"][None, :] + params["b_y"][None, :]  # (B, H)

    # Teacher forcing: trg_0 = vq_num_vocabs (start token), trg_t = x[:, t-1].
    start = jnp.full((B, 1), VQ_VOCAB, dtype=x.dtype)
    trg_seq = jnp.concatenate([start, x[:, :-1]], axis=1)         # (B, T)
    step_in = emb[trg_seq] + y_enc[:, None, :]                    # (B, T, H)
    # time-major, flattened to (T*B, H); extra zero block so the last wave's
    # projection row is just the packed biases.
    step_in = jnp.transpose(step_in, (1, 0, 2)).astype(jnp.float32)
    step_in = step_in.reshape(T * B, HIDDEN)
    step_in_ext = jnp.concatenate(
        [step_in, jnp.zeros((B, HIDDEN), jnp.float32)], axis=0)   # ((T+1)*B, H)

    slab = _pack_weight_slab(params)

    out = pl.pallas_call(
        plug_lstm_kernel,
        out_shape=jax.ShapeDtypeStruct((T * B, VQ_VOCAB), jnp.float32),
        grid_spec=pltpu.PrefetchScalarGridSpec(
            num_scalar_prefetch=0,
            grid=(1,),                                            # single program
            in_specs=[
                pl.BlockSpec(((T + 1) * B, HIDDEN), lambda i: (0, 0)),
                pl.BlockSpec((SLAB_ROWS, 8 * HIDDEN), lambda i: (0, 0)),
            ],
            out_specs=pl.BlockSpec((T * B, VQ_VOCAB), lambda i: (0, 0)),
            scratch_shapes=[
                pltpu.VMEM(((T + 1) * B, 8 * HIDDEN), jnp.float32),  # xb_ref
                pltpu.VMEM((T * B, 2 * HIDDEN), jnp.float32),        # htop_ref
            ]),
        compiler_params=pltpu.CompilerParams(
            dimension_semantics=("arbitrary",)),
    )(step_in_ext, slab)

    # (T*B, V) -> (T, B, V) -> (B, T, V), matching torch.cat(dim=1).
    return jnp.transpose(out.reshape(T, B, VQ_VOCAB), (1, 0, 2))


def reference_forward(params, x, y):
    """Pure-JAX reference of the same computation (for correctness check)."""
    emb = params["embedding"]
    y_enc = y[:, None] * params["w_y"][None, :] + params["b_y"][None, :]
    B, T = x.shape
    start = jnp.full((B, 1), VQ_VOCAB, dtype=x.dtype)
    trg_seq = jnp.concatenate([start, x[:, :-1]], axis=1)
    step_in = emb[trg_seq] + y_enc[:, None, :]
    h = jnp.zeros((NUM_LAYERS, B, HIDDEN), jnp.float32)
    c = jnp.zeros((NUM_LAYERS, B, HIDDEN), jnp.float32)
    logits = []
    for t in range(T):
        xt = step_in[:, t]
        hs, cs = [], []
        for l in range(NUM_LAYERS):
            gates = (xt @ params["w_ih"][l] + h[l] @ params["w_hh"][l]
                     + params["b_gates"][l])
            i_g = jax.nn.sigmoid(gates[:, :HIDDEN])
            f_g = jax.nn.sigmoid(gates[:, HIDDEN:2 * HIDDEN])
            g_g = jnp.tanh(gates[:, 2 * HIDDEN:3 * HIDDEN])
            o_g = jax.nn.sigmoid(gates[:, 3 * HIDDEN:])
            c_new = f_g * c[l] + i_g * g_g
            h_new = o_g * jnp.tanh(c_new)
            hs.append(h_new)
            cs.append(c_new)
            xt = h_new
        h, c = jnp.stack(hs), jnp.stack(cs)
        logits.append(xt @ params["w_dec"] + params["b_dec"])
    return jnp.stack(logits, axis=1)


if __name__ == "__main__":
    key = jax.random.PRNGKey(0)
    keys = jax.random.split(key, 10)
    bound = 1.0 / (HIDDEN ** 0.5)
    params = {
        # nn.Embedding(vq_num_vocabs + 1, hidden_dim)
        "embedding": jax.random.normal(keys[0], (VQ_VOCAB + 1, HIDDEN), jnp.float32),
        # nn.Linear(1, hidden_dim)
        "w_y": jax.random.uniform(keys[1], (HIDDEN,), jnp.float32, -1.0, 1.0),
        "b_y": jax.random.uniform(keys[2], (HIDDEN,), jnp.float32, -1.0, 1.0),
        # nn.LSTM(hidden, hidden, num_layers): weights stored transposed,
        # gate order [i, f, g, o] along last dim; biases b_ih + b_hh combined.
        "w_ih": jax.random.uniform(keys[3], (NUM_LAYERS, HIDDEN, 4 * HIDDEN),
                                   jnp.float32, -bound, bound),
        "w_hh": jax.random.uniform(keys[4], (NUM_LAYERS, HIDDEN, 4 * HIDDEN),
                                   jnp.float32, -bound, bound),
        "b_gates": jax.random.uniform(keys[5], (NUM_LAYERS, 1, 4 * HIDDEN),
                                      jnp.float32, -bound, bound),
        # nn.Linear(hidden_dim, vq_num_vocabs), stored transposed.
        "w_dec": jax.random.uniform(keys[6], (HIDDEN, VQ_VOCAB),
                                    jnp.float32, -bound, bound),
        "b_dec": jax.random.uniform(keys[7], (1, VQ_VOCAB),
                                    jnp.float32, -bound, bound),
    }

    x = jax.random.randint(keys[8], (BATCH, CODE_DIM), 0, VQ_VOCAB, jnp.int32)
    y = jax.random.normal(keys[9], (BATCH,), jnp.float32)

    logits = plug_lstm_forward(params, x, y)
    logits = jax.block_until_ready(logits)

    assert logits.shape == (BATCH, CODE_DIM, VQ_VOCAB)
    ref = reference_forward(params, x, y)
    max_err = float(jnp.max(jnp.abs(logits - ref)))
    assert jnp.allclose(logits, ref, atol=1e-2, rtol=1e-2), max_err
    print("KERNEL_OK")
</pallas_src>

<mosaic_0001>
module attributes {stable_mosaic.version = 11 : i64} {
  func.func @plug_lstm_kernel(%arg0: i32, %arg1: memref<72x32xf32, #tpu.memory_space<vmem>>, %arg2: memref<176x256xf32, #tpu.memory_space<vmem>>, %arg3: memref<64x128xf32, #tpu.memory_space<vmem>>, %arg4: memref<72x256xf32, #tpu.memory_space<vmem>>, %arg5: memref<64x64xf32, #tpu.memory_space<vmem>>) attributes {dimension_semantics = [#tpu.dimension_semantics<arbitrary>], iteration_bounds = array<i64: 1>, scalar_prefetch = 0 : i64, scratch_operands = 2 : i64, tpu.core_type = #tpu.core_type<tc>, window_params = [{pipeline_mode = #tpu.pipeline_mode<synchronous>, transform_indices = @transform_0, window_bounds = array<i64: 72, 32>}, {pipeline_mode = #tpu.pipeline_mode<synchronous>, transform_indices = @transform_1, window_bounds = array<i64: 176, 256>}, {pipeline_mode = #tpu.pipeline_mode<synchronous>, transform_indices = @transform_2, window_bounds = array<i64: 64, 128>}]} {
    %c0 = arith.constant 0 : index
    %c0_0 = arith.constant 0 : index
    %0 = vector.load %arg2[%c0, %c0_0] : memref<176x256xf32, #tpu.memory_space<vmem>>, vector<32x256xf32>
    %c32 = arith.constant 32 : index
    %c0_1 = arith.constant 0 : index
    %1 = vector.load %arg2[%c32, %c0_1] : memref<176x256xf32, #tpu.memory_space<vmem>>, vector<1x256xf32>
    %c0_2 = arith.constant 0 : index
    %c0_3 = arith.constant 0 : index
    %2 = vector.load %arg1[%c0_2, %c0_3] : memref<72x32xf32, #tpu.memory_space<vmem>>, vector<72x32xf32>
    %cst = arith.constant dense<0.000000e+00> : vector<72x256xf32>
    %3 = tpu.matmul %2, %0, %cst {dimension_numbers = #tpu.dot_dimension_numbers<[1], [0], [0], [1], [0, 0, 1, 1], [], []>} : vector<72x32xf32>, vector<32x256xf32>, vector<72x256xf32> -> vector<72x256xf32>
    %4 = vector.broadcast %1 : vector<1x256xf32> to vector<72x256xf32>
    %5 = arith.addf %3, %4 : vector<72x256xf32>
    %c0_4 = arith.constant 0 : index
    %c0_5 = arith.constant 0 : index
    %6 = vector.load %arg4[%c0_4, %c0_5] : memref<72x256xf32, #tpu.memory_space<vmem>>, vector<72x256xf32>
    tpu.vector_store %arg4[%c0_4, %c0_5], %5 {strides = array<i32>} : memref<72x256xf32, #tpu.memory_space<vmem>>, vector<72x256xf32>,
    %c40 = arith.constant 40 : index
    %c0_6 = arith.constant 0 : index
    %7 = vector.load %arg2[%c40, %c0_6] : memref<176x256xf32, #tpu.memory_space<vmem>>, vector<64x256xf32>
    %c0_7 = arith.constant 0 : index
    %c0_8 = arith.constant 0 : index
    %8 = vector.load %arg4[%c0_7, %c0_8] : memref<72x256xf32, #tpu.memory_space<vmem>>, vector<8x256xf32>
    %9 = arith.negf %8 : vector<8x256xf32>
    %10 = math.exp %9 : vector<8x256xf32>
    %cst_9 = arith.constant 1.000000e+00 : f32
    %11 = vector.broadcast %cst_9 : f32 to vector<8x256xf32>
    %12 = arith.addf %11, %10 : vector<8x256xf32>
    %13 = arith.divf %11, %12 : vector<8x256xf32>
    %14 = math.tanh %8 : vector<8x256xf32>
    %15 = tpu.iota {dimensions = array<i32: 1>} : vector<8x64xi32>
    %c32_i32 = arith.constant 32 : i32
    %16 = vector.broadcast %c32_i32 : i32 to vector<8x64xi32>
    %17 = arith.cmpi slt, %15, %16 : vector<8x64xi32>
    %18 = arith.extui %17 : vector<8x64xi1> to vector<8x64xi32>
    %19 = arith.sitofp %18 : vector<8x64xi32> to vector<8x64xf32>
    %20 = vector.extract_strided_slice %13 {offsets = [0, 0], sizes = [8, 64], strides = [1, 1]} : vector<8x256xf32> to vector<8x64xf32>
    %21 = vector.extract_strided_slice %14 {offsets = [0, 128], sizes = [8, 64], strides = [1, 1]} : vector<8x256xf32> to vector<8x64xf32>
    %22 = arith.mulf %20, %21 : vector<8x64xf32>
    %23 = arith.mulf %19, %22 : vector<8x64xf32>
    %24 = vector.extract_strided_slice %13 {offsets = [0, 192], sizes = [8, 64], strides = [1, 1]} : vector<8x256xf32> to vector<8x64xf32>
    %25 = math.tanh %23 : vector<8x64xf32>
    %26 = arith.mulf %24, %25 : vector<8x64xf32>
    %cst_10 = arith.constant dense<0.000000e+00> : vector<8x256xf32>
    %27 = tpu.matmul %26, %7, %cst_10 {dimension_numbers = #tpu.dot_dimension_numbers<[1], [0], [0], [1], [0, 0, 1, 1], [], []>} : vector<8x64xf32>, vector<64x256xf32>, vector<8x256xf32> -> vector<8x256xf32>
    %c8 = arith.constant 8 : index
    %c0_11 = arith.constant 0 : index
    %28 = vector.load %arg4[%c8, %c0_11] : memref<72x256xf32, #tpu.memory_space<vmem>>, vector<8x256xf32>
    %29 = arith.addf %27, %28 : vector<8x256xf32>
    %30 = arith.negf %29 : vector<8x256xf32>
    %31 = math.exp %30 : vector<8x256xf32>
    %cst_12 = arith.constant 1.000000e+00 : f32
    %32 = vector.broadcast %cst_12 : f32 to vector<8x256xf32>
    %33 = arith.addf %32, %31 : vector<8x256xf32>
    %34 = arith.divf %32, %33 : vector<8x256xf32>
    %35 = math.tanh %29 : vector<8x256xf32>
    %36 = vector.extract_strided_slice %34 {offsets = [0, 0], sizes = [8, 64], strides = [1, 1]} : vector<8x256xf32> to vector<8x64xf32>
    %37 = vector.extract_strided_slice %34 {offsets = [0, 64], sizes = [8, 64], strides = [1, 1]} : vector<8x256xf32> to vector<8x64xf32>
    %38 = vector.extract_strided_slice %35 {offsets = [0, 128], sizes = [8, 64], strides = [1, 1]} : vector<8x256xf32> to vector<8x64xf32>
    %39 = vector.extract_strided_slice %34 {offsets = [0, 192], sizes = [8, 64], strides = [1, 1]} : vector<8x256xf32> to vector<8x64xf32>
    %40 = arith.mulf %37, %23 : vector<8x64xf32>
    %41 = arith.mulf %36, %38 : vector<8x64xf32>
    %42 = arith.addf %40, %41 : vector<8x64xf32>
    %43 = math.tanh %42 : vector<8x64xf32>
    %44 = arith.mulf %39, %43 : vector<8x64xf32>
    %c0_13 = arith.constant 0 : index
    %c0_14 = arith.constant 0 : index
    %45 = vector.load %arg5[%c0_13, %c0_14] : memref<64x64xf32, #tpu.memory_space<vmem>>, vector<8x64xf32>
    tpu.vector_store %arg5[%c0_13, %c0_14], %44 {strides = array<i32>} : memref<64x64xf32, #tpu.memory_space<vmem>>, vector<8x64xf32>,
    %cst_15 = arith.constant dense<0.000000e+00> : vector<8x256xf32>
    %46 = tpu.matmul %44, %7, %cst_15 {dimension_numbers = #tpu.dot_dimension_numbers<[1], [0], [0], [1], [0, 0, 1, 1], [], []>} : vector<8x64xf32>, vector<64x256xf32>, vector<8x256xf32> -> vector<8x256xf32>
    %c16 = arith.constant 16 : index
    %c0_16 = arith.constant 0 : index
    %47 = vector.load %arg4[%c16, %c0_16] : memref<72x256xf32, #tpu.memory_space<vmem>>, vector<8x256xf32>
    %48 = arith.addf %46, %47 : vector<8x256xf32>
    %49 = arith.negf %48 : vector<8x256xf32>
    %50 = math.exp %49 : vector<8x256xf32>
    %cst_17 = arith.constant 1.000000e+00 : f32
    %51 = vector.broadcast %cst_17 : f32 to vector<8x256xf32>
    %52 = arith.addf %51, %50 : vector<8x256xf32>
    %53 = arith.divf %51, %52 : vector<8x256xf32>
    %54 = math.tanh %48 : vector<8x256xf32>
    %55 = vector.extract_strided_slice %53 {offsets = [0, 0], sizes = [8, 64], strides = [1, 1]} : vector<8x256xf32> to vector<8x64xf32>
    %56 = vector.extract_strided_slice %53 {offsets = [0, 64], sizes = [8, 64], strides = [1, 1]} : vector<8x256xf32> to vector<8x64xf32>
    %57 = vector.extract_strided_slice %54 {offsets = [0, 128], sizes = [8, 64], strides = [1, 1]} : vector<8x256xf32> to vector<8x64xf32>
    %58 = vector.extract_strided_slice %53 {offsets = [0, 192], sizes = [8, 64], strides = [1, 1]} : vector<8x256xf32> to vector<8x64xf32>
    %59 = arith.mulf %56, %42 : vector<8x64xf32>
    %60 = arith.mulf %55, %57 : vector<8x64xf32>
    %61 = arith.addf %59, %60 : vector<8x64xf32>
    %62 = math.tanh %61 : vector<8x64xf32>
    %63 = arith.mulf %58, %62 : vector<8x64xf32>
    %c8_18 = arith.constant 8 : index
    %c0_19 = arith.constant 0 : index
    %64 = vector.load %arg5[%c8_18, %c0_19] : memref<64x64xf32, #tpu.memory_space<vmem>>, vector<8x64xf32>
    tpu.vector_store %arg5[%c8_18, %c0_19], %63 {strides = array<i32>} : memref<64x64xf32, #tpu.memory_space<vmem>>, vector<8x64xf32>,
    %cst_20 = arith.constant dense<0.000000e+00> : vector<8x256xf32>
    %65 = tpu.matmul %63, %7, %cst_20 {dimension_numbers = #tpu.dot_dimension_numbers<[1], [0], [0], [1], [0, 0, 1, 1], [], []>} : vector<8x64xf32>, vector<64x256xf32>, vector<8x256xf32> -> vector<8x256xf32>
    %c24 = arith.constant 24 : index
    %c0_21 = arith.constant 0 : index
    %66 = vector.load %arg4[%c24, %c0_21] : memref<72x256xf32, #tpu.memory_space<vmem>>, vector<8x256xf32>
    %67 = arith.addf %65, %66 : vector<8x256xf32>
    %68 = arith.negf %67 : vector<8x256xf32>
    %69 = math.exp %68 : vector<8x256xf32>
    %cst_22 = arith.constant 1.000000e+00 : f32
    %70 = vector.broadcast %cst_22 : f32 to vector<8x256xf32>
    %71 = arith.addf %70, %69 : vector<8x256xf32>
    %72 = arith.divf %70, %71 : vector<8x256xf32>
    %73 = math.tanh %67 : vector<8x256xf32>
    %74 = vector.extract_strided_slice %72 {offsets = [0, 0], sizes = [8, 64], strides = [1, 1]} : vector<8x256xf32> to vector<8x64xf32>
    %75 = vector.extract_strided_slice %72 {offsets = [0, 64], sizes = [8, 64], strides = [1, 1]} : vector<8x256xf32> to vector<8x64xf32>
    %76 = vector.extract_strided_slice %73 {offsets = [0, 128], sizes = [8, 64], strides = [1, 1]} : vector<8x256xf32> to vector<8x64xf32>
    %77 = vector.extract_strided_slice %72 {offsets = [0, 192], sizes = [8, 64], strides = [1, 1]} : vector<8x256xf32> to vector<8x64xf32>
    %78 = arith.mulf %75, %61 : vector<8x64xf32>
    %79 = arith.mulf %74, %76 : vector<8x64xf32>
    %80 = arith.addf %78, %79 : vector<8x64xf32>
    %81 = math.tanh %80 : vector<8x64xf32>
    %82 = arith.mulf %77, %81 : vector<8x64xf32>
    %c16_23 = arith.constant 16 : index
    %c0_24 = arith.constant 0 : index
    %83 = vector.load %arg5[%c16_23, %c0_24] : memref<64x64xf32, #tpu.memory_space<vmem>>, vector<8x64xf32>
    tpu.vector_store %arg5[%c16_23, %c0_24], %82 {strides = array<i32>} : memref<64x64xf32, #tpu.memory_space<vmem>>, vector<8x64xf32>,
    %cst_25 = arith.constant dense<0.000000e+00> : vector<8x256xf32>
    %84 = tpu.matmul %82, %7, %cst_25 {dimension_numbers = #tpu.dot_dimension_numbers<[1], [0], [0], [1], [0, 0, 1, 1], [], []>} : vector<8x64xf32>, vector<64x256xf32>, vector<8x256xf32> -> vector<8x256xf32>
    %c32_26 = arith.constant 32 : index
    %c0_27 = arith.constant 0 : index
    %85 = vector.load %arg4[%c32_26, %c0_27] : memref<72x256xf32, #tpu.memory_space<vmem>>, vector<8x256xf32>
    %86 = arith.addf %84, %85 : vector<8x256xf32>
    %87 = arith.negf %86 : vector<8x256xf32>
    %88 = math.exp %87 : vector<8x256xf32>
    %cst_28 = arith.constant 1.000000e+00 : f32
    %89 = vector.broadcast %cst_28 : f32 to vector<8x256xf32>
    %90 = arith.addf %89, %88 : vector<8x256xf32>
    %91 = arith.divf %89, %90 : vector<8x256xf32>
    %92 = math.tanh %86 : vector<8x256xf32>
    %93 = vector.extract_strided_slice %91 {offsets = [0, 0], sizes = [8, 64], strides = [1, 1]} : vector<8x256xf32> to vector<8x64xf32>
    %94 = vector.extract_strided_slice %91 {offsets = [0, 64], sizes = [8, 64], strides = [1, 1]} : vector<8x256xf32> to vector<8x64xf32>
    %95 = vector.extract_strided_slice %92 {offsets = [0, 128], sizes = [8, 64], strides = [1, 1]} : vector<8x256xf32> to vector<8x64xf32>
    %96 = vector.extract_strided_slice %91 {offsets = [0, 192], sizes = [8, 64], strides = [1, 1]} : vector<8x256xf32> to vector<8x64xf32>
    %97 = arith.mulf %94, %80 : vector<8x64xf32>
    %98 = arith.mulf %93, %95 : vector<8x64xf32>
    %99 = arith.addf %97, %98 : vector<8x64xf32>
    %100 = math.tanh %99 : vector<8x64xf32>
    %101 = arith.mulf %96, %100 : vector<8x64xf32>
    %c24_29 = arith.constant 24 : index
    %c0_30 = arith.constant 0 : index
    %102 = vector.load %arg5[%c24_29, %c0_30] : memref<64x64xf32, #tpu.memory_space<vmem>>, vector<8x64xf32>
    tpu.vector_store %arg5[%c24_29, %c0_30], %101 {strides = array<i32>} : memref<64x64xf32, #tpu.memory_space<vmem>>, vector<8x64xf32>,
    %cst_31 = arith.constant dense<0.000000e+00> : vector<8x256xf32>
    %103 = tpu.matmul %101, %7, %cst_31 {dimension_numbers = #tpu.dot_dimension_numbers<[1], [0], [0], [1], [0, 0, 1, 1], [], []>} : vector<8x64xf32>, vector<64x256xf32>, vector<8x256xf32> -> vector<8x256xf32>
    %c40_32 = arith.constant 40 : index
    %c0_33 = arith.constant 0 : index
    %104 = vector.load %arg4[%c40_32, %c0_33] : memref<72x256xf32, #tpu.memory_space<vmem>>, vector<8x256xf32>
    %105 = arith.addf %103, %104 : vector<8x256xf32>
    %106 = arith.negf %105 : vector<8x256xf32>
    %107 = math.exp %106 : vector<8x256xf32>
    %cst_34 = arith.constant 1.000000e+00 : f32
    %108 = vector.broadcast %cst_34 : f32 to vector<8x256xf32>
    %109 = arith.addf %108, %107 : vector<8x256xf32>
    %110 = arith.divf %108, %109 : vector<8x256xf32>
    %111 = math.tanh %105 : vector<8x256xf32>
    %112 = vector.extract_strided_slice %110 {offsets = [0, 0], sizes = [8, 64], strides = [1, 1]} : vector<8x256xf32> to vector<8x64xf32>
    %113 = vector.extract_strided_slice %110 {offsets = [0, 64], sizes = [8, 64], strides = [1, 1]} : vector<8x256xf32> to vector<8x64xf32>
    %114 = vector.extract_strided_slice %111 {offsets = [0, 128], sizes = [8, 64], strides = [1, 1]} : vector<8x256xf32> to vector<8x64xf32>
    %115 = vector.extract_strided_slice %110 {offsets = [0, 192], sizes = [8, 64], strides = [1, 1]} : vector<8x256xf32> to vector<8x64xf32>
    %116 = arith.mulf %113, %99 : vector<8x64xf32>
    %117 = arith.mulf %112, %114 : vector<8x64xf32>
    %118 = arith.addf %116, %117 : vector<8x64xf32>
    %119 = math.tanh %118 : vector<8x64xf32>
    %120 = arith.mulf %115, %119 : vector<8x64xf32>
    %c32_35 = arith.constant 32 : index
    %c0_36 = arith.constant 0 : index
    %121 = vector.load %arg5[%c32_35, %c0_36] : memref<64x64xf32, #tpu.memory_space<vmem>>, vector<8x64xf32>
    tpu.vector_store %arg5[%c32_35, %c0_36], %120 {strides = array<i32>} : memref<64x64xf32, #tpu.memory_space<vmem>>, vector<8x64xf32>,
    %cst_37 = arith.constant dense<0.000000e+00> : vector<8x256xf32>
    %122 = tpu.matmul %120, %7, %cst_37 {dimension_numbers = #tpu.dot_dimension_numbers<[1], [0], [0], [1], [0, 0, 1, 1], [], []>} : vector<8x64xf32>, vector<64x256xf32>, vector<8x256xf32> -> vector<8x256xf32>
    %c48 = arith.constant 48 : index
    %c0_38 = arith.constant 0 : index
    %123 = vector.load %arg4[%c48, %c0_38] : memref<72x256xf32, #tpu.memory_space<vmem>>, vector<8x256xf32>
    %124 = arith.addf %122, %123 : vector<8x256xf32>
    %125 = arith.negf %124 : vector<8x256xf32>
    %126 = math.exp %125 : vector<8x256xf32>
    %cst_39 = arith.constant 1.000000e+00 : f32
    %127 = vector.broadcast %cst_39 : f32 to vector<8x256xf32>
    %128 = arith.addf %127, %126 : vector<8x256xf32>
    %129 = arith.divf %127, %128 : vector<8x256xf32>
    %130 = math.tanh %124 : vector<8x256xf32>
    %131 = vector.extract_strided_slice %129 {offsets = [0, 0], sizes = [8, 64], strides = [1, 1]} : vector<8x256xf32> to vector<8x64xf32>
    %132 = vector.extract_strided_slice %129 {offsets = [0, 64], sizes = [8, 64], strides = [1, 1]} : vector<8x256xf32> to vector<8x64xf32>
    %133 = vector.extract_strided_slice %130 {offsets = [0, 128], sizes = [8, 64], strides = [1, 1]} : vector<8x256xf32> to vector<8x64xf32>
    %134 = vector.extract_strided_slice %129 {offsets = [0, 192], sizes = [8, 64], strides = [1, 1]} : vector<8x256xf32> to vector<8x64xf32>
    %135 = arith.mulf %132, %118 : vector<8x64xf32>
    %136 = arith.mulf %131, %133 : vector<8x64xf32>
    %137 = arith.addf %135, %136 : vector<8x64xf32>
    %138 = math.tanh %137 : vector<8x64xf32>
    %139 = arith.mulf %134, %138 : vector<8x64xf32>
    %c40_40 = arith.constant 40 : index
    %c0_41 = arith.constant 0 : index
    %140 = vector.load %arg5[%c40_40, %c0_41] : memref<64x64xf32, #tpu.memory_space<vmem>>, vector<8x64xf32>
    tpu.vector_store %arg5[%c40_40, %c0_41], %139 {strides = array<i32>} : memref<64x64xf32, #tpu.memory_space<vmem>>, vector<8x64xf32>,
    %cst_42 = arith.constant dense<0.000000e+00> : vector<8x256xf32>
    %141 = tpu.matmul %139, %7, %cst_42 {dimension_numbers = #tpu.dot_dimension_numbers<[1], [0], [0], [1], [0, 0, 1, 1], [], []>} : vector<8x64xf32>, vector<64x256xf32>, vector<8x256xf32> -> vector<8x256xf32>
    %c56 = arith.constant 56 : index
    %c0_43 = arith.constant 0 : index
    %142 = vector.load %arg4[%c56, %c0_43] : memref<72x256xf32, #tpu.memory_space<vmem>>, vector<8x256xf32>
    %143 = arith.addf %141, %142 : vector<8x256xf32>
    %144 = arith.negf %143 : vector<8x256xf32>
    %145 = math.exp %144 : vector<8x256xf32>
    %cst_44 = arith.constant 1.000000e+00 : f32
    %146 = vector.broadcast %cst_44 : f32 to vector<8x256xf32>
    %147 = arith.addf %146, %145 : vector<8x256xf32>
    %148 = arith.divf %146, %147 : vector<8x256xf32>
    %149 = math.tanh %143 : vector<8x256xf32>
    %150 = vector.extract_strided_slice %148 {offsets = [0, 0], sizes = [8, 64], strides = [1, 1]} : vector<8x256xf32> to vector<8x64xf32>
    %151 = vector.extract_strided_slice %148 {offsets = [0, 64], sizes = [8, 64], strides = [1, 1]} : vector<8x256xf32> to vector<8x64xf32>
    %152 = vector.extract_strided_slice %149 {offsets = [0, 128], sizes = [8, 64], strides = [1, 1]} : vector<8x256xf32> to vector<8x64xf32>
    %153 = vector.extract_strided_slice %148 {offsets = [0, 192], sizes = [8, 64], strides = [1, 1]} : vector<8x256xf32> to vector<8x64xf32>
    %154 = arith.mulf %151, %137 : vector<8x64xf32>
    %155 = arith.mulf %150, %152 : vector<8x64xf32>
    %156 = arith.addf %154, %155 : vector<8x64xf32>
    %157 = math.tanh %156 : vector<8x64xf32>
    %158 = arith.mulf %153, %157 : vector<8x64xf32>
    %c48_45 = arith.constant 48 : index
    %c0_46 = arith.constant 0 : index
    %159 = vector.load %arg5[%c48_45, %c0_46] : memref<64x64xf32, #tpu.memory_space<vmem>>, vector<8x64xf32>
    tpu.vector_store %arg5[%c48_45, %c0_46], %158 {strides = array<i32>} : memref<64x64xf32, #tpu.memory_space<vmem>>, vector<8x64xf32>,
    %cst_47 = arith.constant dense<0.000000e+00> : vector<8x256xf32>
    %160 = tpu.matmul %158, %7, %cst_47 {dimension_numbers = #tpu.dot_dimension_numbers<[1], [0], [0], [1], [0, 0, 1, 1], [], []>} : vector<8x64xf32>, vector<64x256xf32>, vector<8x256xf32> -> vector<8x256xf32>
    %c64 = arith.constant 64 : index
    %c0_48 = arith.constant 0 : index
    %161 = vector.load %arg4[%c64, %c0_48] : memref<72x256xf32, #tpu.memory_space<vmem>>, vector<8x256xf32>
    %162 = arith.addf %160, %161 : vector<8x256xf32>
    %163 = arith.negf %162 : vector<8x256xf32>
    %164 = math.exp %163 : vector<8x256xf32>
    %cst_49 = arith.constant 1.000000e+00 : f32
    %165 = vector.broadcast %cst_49 : f32 to vector<8x256xf32>
    %166 = arith.addf %165, %164 : vector<8x256xf32>
    %167 = arith.divf %165, %166 : vector<8x256xf32>
    %168 = math.tanh %162 : vector<8x256xf32>
    %169 = vector.extract_strided_slice %167 {offsets = [0, 0], sizes = [8, 64], strides = [1, 1]} : vector<8x256xf32> to vector<8x64xf32>
    %170 = vector.extract_strided_slice %167 {offsets = [0, 64], sizes = [8, 64], strides = [1, 1]} : vector<8x256xf32> to vector<8x64xf32>
    %171 = vector.extract_strided_slice %168 {offsets = [0, 128], sizes = [8, 64], strides = [1, 1]} : vector<8x256xf32> to vector<8x64xf32>
    %172 = vector.extract_strided_slice %167 {offsets = [0, 192], sizes = [8, 64], strides = [1, 1]} : vector<8x256xf32> to vector<8x64xf32>
    %173 = arith.mulf %170, %156 : vector<8x64xf32>
    %174 = arith.mulf %169, %171 : vector<8x64xf32>
    %175 = arith.addf %173, %174 : vector<8x64xf32>
    %176 = math.tanh %175 : vector<8x64xf32>
    %177 = arith.mulf %172, %176 : vector<8x64xf32>
    %c56_50 = arith.constant 56 : index
    %c0_51 = arith.constant 0 : index
    %178 = vector.load %arg5[%c56_50, %c0_51] : memref<64x64xf32, #tpu.memory_space<vmem>>, vector<8x64xf32>
    tpu.vector_store %arg5[%c56_50, %c0_51], %177 {strides = array<i32>} : memref<64x64xf32, #tpu.memory_space<vmem>>, vector<8x64xf32>,
    %c104 = arith.constant 104 : index
    %c0_52 = arith.constant 0 : index
    %179 = vector.load %arg2[%c104, %c0_52] : memref<176x256xf32, #tpu.memory_space<vmem>>, vector<64x128xf32>
    %c168 = arith.constant 168 : index
    %c0_53 = arith.constant 0 : index
    %180 = vector.load %arg2[%c168, %c0_53] : memref<176x256xf32, #tpu.memory_space<vmem>>, vector<1x128xf32>
    %c0_54 = arith.constant 0 : index
    %c0_55 = arith.constant 0 : index
    %181 = vector.load %arg5[%c0_54, %c0_55] : memref<64x64xf32, #tpu.memory_space<vmem>>, vector<64x64xf32>
    %cst_56 = arith.constant dense<0.000000e+00> : vector<64x128xf32>
    %182 = tpu.matmul %181, %179, %cst_56 {dimension_numbers = #tpu.dot_dimension_numbers<[1], [0], [0], [1], [0, 0, 1, 1], [], []>} : vector<64x64xf32>, vector<64x128xf32>, vector<64x128xf32> -> vector<64x128xf32>
    %183 = vector.broadcast %180 : vector<1x128xf32> to vector<64x128xf32>
    %184 = arith.addf %182, %183 : vector<64x128xf32>
    %c0_57 = arith.constant 0 : index
    %c0_58 = arith.constant 0 : index
    %185 = vector.load %arg3[%c0_57, %c0_58] : memref<64x128xf32, #tpu.memory_space<vmem>>, vector<64x128xf32>
    tpu.vector_store %arg3[%c0_57, %c0_58], %184 {strides = array<i32>} : memref<64x128xf32, #tpu.memory_space<vmem>>, vector<64x128xf32>,
    return
  }
  func.func @transform_0(%arg0: i32) -> (i32, i32) {
    %c0_i32 = arith.constant 0 : i32
    %c0_i32_0 = arith.constant 0 : i32
    %c0_i32_1 = arith.constant 0 : i32
    return %c0_i32, %c0_i32_0 : i32, i32
  }
  func.func @transform_1(%arg0: i32) -> (i32, i32) {
    %c0_i32 = arith.constant 0 : i32
    %c0_i32_0 = arith.constant 0 : i32
    %c0_i32_1 = arith.constant 0 : i32
    return %c0_i32, %c0_i32_0 : i32, i32
  }
  func.func @transform_2(%arg0: i32) -> (i32, i32) {
    %c0_i32 = arith.constant 0 : i32
    %c0_i32_0 = arith.constant 0 : i32
    %c0_i32_1 = arith.constant 0 : i32
    return %c0_i32, %c0_i32_0 : i32, i32
  }
}

</mosaic_0001>

<llo_original>
// kernel: tpu_custom_call.1
$region0: #{tpu_custom_call.1}
  #allocation0 [shape = 'u32[]', space=smem, size = 0x4, offset = 0x4, fixed_abs, tag = 'smem constant byte address 0x4 - core index']
  #allocation1 [shape = 'u32[144,128]{1,0:T(1,128)}', space=vmem, size = 0x12000, scoped, tag = 'internal scratch']
  #allocation2 [shape = 'f32[72,256]{1,0:T(8,128)}', space=vmem, size = 0x12000, scoped, tag = 'scratch operand']
  #allocation3 [shape = 'f32[64,64]{1,0:T(8,128)}', space=vmem, size = 0x8000, scoped, tag = 'scratch operand']
  %s0 = inlined_call_operand.vmem [shape: f32[72,32], index: 0, kind: input, shape index: {}]
  %s1 = inlined_call_operand.hbm [shape: f32[176,256], index: 1, kind: input, shape index: {}]
  %s2 = inlined_call_operand.hbm [shape: f32[64,128], index: 2, kind: output, shape index: {}]
  %s3 = sld [smem:[#allocation0]]
  $region22: #{tpu_custom_call.1} parent=0
    _
  %s5 = ssub.s32 1, %s3
  %s6 = scalar_select 0, %s5, %s3
  $region1: #{tpu_custom_call.1} parent=0
    #allocation4 [shape = 'u8[180224]{0}', space=vmem, size = 0x2c000, scoped, tag = 'input window, operand 1, single buffered']
    #allocation5 [shape = 's32[1]{0}', space=sflag, size = 0x4, scoped, tag = 'scoped memory for tpu_custom_call.1']
    #allocation6 [shape = 's32[1]{0}', space=sflag, size = 0x4, scoped, tag = 'scoped memory for tpu_custom_call.1']
    #allocation7 [shape = 'u8[32768]{0}', space=vmem, size = 0x8000, scoped, tag = 'output window, operand 0, single buffered']
    %7 = vsyncpa [#allocation5], 0
    %8 = vsyncpa [#allocation6], 0
    // Predicated region
    $region2: #{tpu_custom_call.1} parent=1 // pred_check
      _
    $region3: #{tpu_custom_call.1} parent=1 // pred_check_branch
      %10 = sbr.rel (0) target = $region5
    $region4: #{tpu_custom_call.1} parent=1 // pred_region
      _
    $region5: #{tpu_custom_call.1} parent=1 // pred_fallthru
      _
    // Predicated region
    $region6: #{tpu_custom_call.1} parent=1 // pred_check
      _
    $region7: #{tpu_custom_call.1} parent=1 // pred_check_branch
      %12 = sbr.rel (0) target = $region9
    $region8: #{tpu_custom_call.1} parent=1 // pred_region
      %s14 = ssub.s32 5632, 5632
      %15 = vsyncadd [#allocation5], %s14
      %s16 = sshll.u32 [#allocation4], 4
      %s17 = int_to_ptr.vmem [resolvable:$true] %s16
      %22 = dma.hbm_to_vmem [thread:$0]  %s1, 5632, %s17, [#allocation5], 256, 256, 16
    $region9: #{tpu_custom_call.1} parent=1 // pred_fallthru
      _
    // Predicated region
    $region10: #{tpu_custom_call.1} parent=1 // pred_check
      _
    $region11: #{tpu_custom_call.1} parent=1 // pred_check_branch
      %24 = sbr.rel (0) target = $region13
    $region12: #{tpu_custom_call.1} parent=1 // pred_region
      %25 = dma.done [#allocation5], 5632
    $region13: #{tpu_custom_call.1} parent=1 // pred_fallthru
      _
    %v26 = vld [vmem:[#allocation4] sm:$0xff]
    %v27 = vld [vmem:[#allocation4 + $0x8] sm:$0xff]
    %v28 = vld [vmem:[#allocation4 + $0x10] sm:$0xff]
    %v29 = vld [vmem:[#allocation4 + $0x18] sm:$0xff]
    %v30 = vld [vmem:[#allocation4 + $0x20] sm:$0xff]
    %v31 = vld [vmem:[#allocation4 + $0x28] sm:$0xff]
    %v32 = vld [vmem:[#allocation4 + $0x30] sm:$0xff]
    %v33 = vld [vmem:[#allocation4 + $0x38] sm:$0xff]
    %s34 = scalar_lea.vmem [#allocation4], 64
    %v35 = vld [vmem:[%s34] ss:$8 sm:$0x3]
    %v36 = vld [vmem:[%s0] sm:$0xff]
    %v37 = vld [vmem:[%s0 + $0x8] sm:$0xff]
    %v38 = vld [vmem:[%s0 + $0x10] sm:$0xff]
    %v39 = vld [vmem:[%s0 + $0x18] sm:$0xff]
    %v40 = vld [vmem:[%s0 + $0x20] sm:$0xff]
    %v41 = vld [vmem:[%s0 + $0x28] sm:$0xff]
    %v42 = vld [vmem:[%s0 + $0x30] sm:$0xff]
    %v43 = vld [vmem:[%s0 + $0x38] sm:$0xff]
    %v44 = vld [vmem:[%s0 + $0x40] sm:$0xff]
    %v46 = vlaneseq
    %v47 = vshrl.u32 %v46, 7
    %v48 = vsub.s32 0, %v47
    %v49 = vrot.slane %v35, %v48
    %v50 = vlaneseq
    %v51 = vshrl.u32 %v50, 7
    %v52 = vsub.s32 1, %v51
    %v53 = vrot.slane %v35, %v52
    %vm56 = vcmask 261120
    %v58 = vsel %vm56, %v36, 0
    %v61 = vsel %vm56, %v37, 0
    %v64 = vsel %vm56, %v38, 0
    %v67 = vsel %vm56, %v39, 0
    %v70 = vsel %vm56, %v40, 0
    %v73 = vsel %vm56, %v41, 0
    %v76 = vsel %vm56, %v42, 0
    %v79 = vsel %vm56, %v43, 0
    %v82 = vsel %vm56, %v44, 0
    %84 = vmatprep.subr.mxu0 %v27
    %85 = vmatpush1.msra.mxu0 %v26
    %86 = vmatprep.subr.mxu0 %v29
    %87 = vmatpush1.msra.mxu0 %v28
    %88 = vmatprep.subr.mxu0 %v31
    %89 = vmatpush1.msra.mxu0 %v30
    %90 = vmatprep.subr.mxu0 %v33
    %91 = vmatpush1.msra.mxu0 %v32
    %92 = vmatprep.subr.mxu0 0.0
    %93 = vmatpush1.msra.mxu0 0.0
    %94 = vmatprep.subr.mxu0 0.0
    %95 = vmatpush1.msra.mxu0 0.0
    %96 = vmatprep.subr.mxu0 0.0
    %97 = vmatpush1.msra.mxu0 0.0
    %98 = vmatprep.subr.mxu0 0.0
    %99 = vmatpush1.msra.mxu0 0.0
    %100 = vmatprep.subr.mxu0 0.0
    %101 = vmatpush1.msra.mxu0 0.0
    %102 = vmatprep.subr.mxu0 0.0
    %103 = vmatpush1.msra.mxu0 0.0
    %104 = vmatprep.subr.mxu0 0.0
    %105 = vmatpush1.msra.mxu0 0.0
    %106 = vmatprep.subr.mxu0 0.0
    %107 = vmatpush1.msra.mxu0 0.0
    %108 = vmatprep.subr.mxu0 0.0
    %109 = vmatpush1.msra.mxu0 0.0
    %110 = vmatprep.subr.mxu0 0.0
    %111 = vmatpush1.msra.mxu0 0.0
    %112 = vmatprep.subr.mxu0 0.0
    %113 = vmatpush1.msra.mxu0 0.0
    %114 = vmatprep.subr.mxu0 0.0
    %115 = vmatpush1.msra.mxu0 0.0
    %116 = vmatprep.subr.mxu0 0.0
    %117 = vmatpush1.msra.mxu0 0.0
    %118 = vmatprep.subr.mxu0 0.0
    %119 = vmatpush1.msra.mxu0 0.0
    %120 = vmatprep.subr.mxu0 0.0
    %121 = vmatpush1.msra.mxu0 0.0
    %122 = vmatprep.subr.mxu0 0.0
    %123 = vmatpush1.msra.mxu0 0.0
    %124 = vmatprep.subr.mxu0 0.0
    %125 = vmatpush1.msra.mxu0 0.0
    %126 = vmatprep.subr.mxu0 0.0
    %127 = vmatpush1.msra.mxu0 0.0
    %128 = vmatprep.subr.mxu0 0.0
    %129 = vmatpush1.msra.mxu0 0.0
    %130 = vmatprep.subr.mxu0 0.0
    %131 = vmatpush1.msra.mxu0 0.0
    %132 = vmatprep.subr.mxu0 0.0
    %133 = vmatpush1.msra.mxu0 0.0
    %134 = vmatprep.subr.mxu0 0.0
    %135 = vmatpush1.msra.mxu0 0.0
    %136 = vmatprep.subr.mxu0 0.0
    %137 = vmatpush1.msra.mxu0 0.0
    %138 = vmatprep.subr.mxu0 0.0
    %139 = vmatpush1.msra.mxu0 0.0
    %140 = vmatprep.subr.mxu0 0.0
    %141 = vmatpush1.msra.mxu0 0.0
    %142 = vmatprep.subr.mxu0 0.0
    %143 = vmatpush1.msra.mxu0 0.0
    %144 = vmatprep.subr.mxu0 0.0
    %145 = vmatpush1.msra.mxu0 0.0
    %146 = vmatprep.subr.mxu0 0.0
    %147 = vmatpush1.msra.mxu0 0.0
    %148 = vmatprep.mubr.f32.mxu0 0.0
    %149 = vmatmul.mubr.f32.gmra.mrb[0].mxu0 %v58
    %v150 = vpop.f32.mrb[0].mxu0
    %v151 = vadd.f32 %v49, %v150
    %v152 = vpop.f32.mrb[0].mxu0
    %v153 = vadd.f32 %v53, %v152
    %154 = vmatprep.mubr.f32.mxu0 0.0
    %155 = vmatmul.mubr.f32.gmra.mrb[0].mxu0 %v61
    %v156 = vpop.f32.mrb[0].mxu0
    %v157 = vadd.f32 %v49, %v156
    %v158 = vpop.f32.mrb[0].mxu0
    %v159 = vadd.f32 %v53, %v158
    %160 = vmatprep.mubr.f32.mxu0 0.0
    %161 = vmatmul.mubr.f32.gmra.mrb[0].mxu0 %v64
    %v162 = vpop.f32.mrb[0].mxu0
    %v163 = vadd.f32 %v49, %v162
    %v164 = vpop.f32.mrb[0].mxu0
    %v165 = vadd.f32 %v53, %v164
    %166 = vmatprep.mubr.f32.mxu0 0.0
    %167 = vmatmul.mubr.f32.gmra.mrb[0].mxu0 %v67
    %v168 = vpop.f32.mrb[0].mxu0
    %v169 = vadd.f32 %v49, %v168
    %v170 = vpop.f32.mrb[0].mxu0
    %v171 = vadd.f32 %v53, %v170
    %172 = vmatprep.mubr.f32.mxu0 0.0
    %173 = vmatmul.mubr.f32.gmra.mrb[0].mxu0 %v70
    %v174 = vpop.f32.mrb[0].mxu0
    %v175 = vadd.f32 %v49, %v174
    %v176 = vpop.f32.mrb[0].mxu0
    %v177 = vadd.f32 %v53, %v176
    %178 = vmatprep.mubr.f32.mxu0 0.0
    %179 = vmatmul.mubr.f32.gmra.mrb[0].mxu0 %v73
    %v180 = vpop.f32.mrb[0].mxu0
    %v181 = vadd.f32 %v49, %v180
    %v182 = vpop.f32.mrb[0].mxu0
    %v183 = vadd.f32 %v53, %v182
    %184 = vmatprep.mubr.f32.mxu0 0.0
    %185 = vmatmul.mubr.f32.gmra.mrb[0].mxu0 %v76
    %v186 = vpop.f32.mrb[0].mxu0
    %v187 = vadd.f32 %v49, %v186
    %v188 = vpop.f32.mrb[0].mxu0
    %v189 = vadd.f32 %v53, %v188
    %190 = vmatprep.mubr.f32.mxu0 0.0
    %191 = vmatmul.mubr.f32.gmra.mrb[0].mxu0 %v79
    %v192 = vpop.f32.mrb[0].mxu0
    %v193 = vadd.f32 %v49, %v192
    %v194 = vpop.f32.mrb[0].mxu0
    %v195 = vadd.f32 %v53, %v194
    %196 = vmatprep.mubr.f32.mxu0 0.0
    %197 = vmatmul.mubr.f32.gmra.mrb[0].mxu0 %v82
    %v198 = vpop.f32.mrb[0].mxu0
    %v199 = vadd.f32 %v49, %v198
    %v200 = vpop.f32.mrb[0].mxu0
    %v201 = vadd.f32 %v53, %v200
    %202 = vdwg.mxu0
    %203 = vst [vmem:[#allocation2] sm:$0xff] %v151
    %204 = vst [vmem:[#allocation2 + $0x8] sm:$0xff] %v153
    %205 = vst [vmem:[#allocation2 + $0x10] sm:$0xff] %v157
    %206 = vst [vmem:[#allocation2 + $0x18] sm:$0xff] %v159
    %207 = vst [vmem:[#allocation2 + $0x20] sm:$0xff] %v163
    %208 = vst [vmem:[#allocation2 + $0x28] sm:$0xff] %v165
    %209 = vst [vmem:[#allocation2 + $0x30] sm:$0xff] %v169
    %210 = vst [vmem:[#allocation2 + $0x38] sm:$0xff] %v171
    %211 = vst [vmem:[#allocation2 + $0x40] sm:$0xff] %v175
    %212 = vst [vmem:[#allocation2 + $0x48] sm:$0xff] %v177
    %213 = vst [vmem:[#allocation2 + $0x50] sm:$0xff] %v181
    %214 = vst [vmem:[#allocation2 + $0x58] sm:$0xff] %v183
    %215 = vst [vmem:[#allocation2 + $0x60] sm:$0xff] %v187
    %216 = vst [vmem:[#allocation2 + $0x68] sm:$0xff] %v189
    %217 = vst [vmem:[#allocation2 + $0x70] sm:$0xff] %v193
    %218 = vst [vmem:[#allocation2 + $0x78] sm:$0xff] %v195
    %219 = vst [vmem:[#allocation2 + $0x80] sm:$0xff] %v199
    %220 = vst [vmem:[#allocation2 + $0x88] sm:$0xff] %v201
    %v221 = vld [vmem:[#allocation4 + $0x50] sm:$0xff]
    %v222 = vld [vmem:[#allocation4 + $0x58] sm:$0xff]
    %v223 = vld [vmem:[#allocation4 + $0x60] sm:$0xff]
    %v224 = vld [vmem:[#allocation4 + $0x68] sm:$0xff]
    %v225 = vld [vmem:[#allocation4 + $0x70] sm:$0xff]
    %v226 = vld [vmem:[#allocation4 + $0x78] sm:$0xff]
    %v227 = vld [vmem:[#allocation4 + $0x80] sm:$0xff]
    %v228 = vld [vmem:[#allocation4 + $0x88] sm:$0xff]
    %v229 = vld [vmem:[#allocation4 + $0x90] sm:$0xff]
    %v230 = vld [vmem:[#allocation4 + $0x98] sm:$0xff]
    %v231 = vld [vmem:[#allocation4 + $0xa0] sm:$0xff]
    %v232 = vld [vmem:[#allocation4 + $0xa8] sm:$0xff]
    %v233 = vld [vmem:[#allocation4 + $0xb0] sm:$0xff]
    %v234 = vld [vmem:[#allocation4 + $0xb8] sm:$0xff]
    %v235 = vld [vmem:[#allocation4 + $0xc0] sm:$0xff]
    %v236 = vld [vmem:[#allocation4 + $0xc8] sm:$0xff]
    %v237 = vld [vmem:[#allocation2] sm:$0xff]
    %v238 = vld [vmem:[#allocation2 + $0x8] sm:$0xff]
    %v239 = vxor.u32 %v237, 2147483648
    %v240 = vxor.u32 %v238, 2147483648
    %v241 = vmul.f32 %v239, 1.442695
    %v242 = vpow.pop %v241
    %v243 = vmul.f32 %v240, 1.442695
    %v244 = vpow.pop %v243
    %v245 = vadd.f32 %v242, 1.0
    %v246 = vadd.f32 %v244, 1.0
    %v247 = vrcp.pop %v245
    %v248 = vmul.f32 1.0, %v247
    %v249 = vrcp.pop %v246
    %v250 = vmul.f32 1.0, %v249
    %v251 = vtanh.pop %v238
    %v252 = vlaneseq
    %v253 = vand.u32 %v252, 127
    %vm254 = vcmp.lt.s32.totalorder %v253, 32
    %v255 = vsel %vm254, 1, 0
    %v256 = vcvt.s32.f32 %v255
    %v257 = vmul.f32 %v248, %v251
    %v258 = vmul.f32 %v256, %v257
    %v259 = vtanh.pop %v258
    %261 = vrot.lane.b32.xlu0 %v259, 64
    %v262 = vpop.permute.xlu0 %261
    %v264 = vmul.f32 %v250, %v262
    %v265 = vld [vmem:[#allocation2 + $0x10] sm:$0xff]
    %v266 = vld [vmem:[#allocation2 + $0x18] sm:$0xff]
    %268 = vrot.lane.b32.xlu0 %v264, 64
    %v269 = vpop.permute.xlu0 %268
    %vm270 = vcmask 523264
    %v271 = vsel %vm270, %v269, 0
    %273 = vmatprep.subr.mxu0 %v222
    %274 = vmatpush1.msra.mxu0 %v221
    %275 = vmatprep.subr.mxu0 %v224
    %276 = vmatpush1.msra.mxu0 %v223
    %277 = vmatprep.subr.mxu0 %v226
    %278 = vmatpush1.msra.mxu0 %v225
    %279 = vmatprep.subr.mxu0 %v228
    %280 = vmatpush1.msra.mxu0 %v227
    %281 = vmatprep.subr.mxu0 %v230
    %282 = vmatpush1.msra.mxu0 %v229
    %283 = vmatprep.subr.mxu0 %v232
    %284 = vmatpush1.msra.mxu0 %v231
    %285 = vmatprep.subr.mxu0 %v234
    %286 = vmatpush1.msra.mxu0 %v233
    %287 = vmatprep.subr.mxu0 %v236
    %288 = vmatpush1.msra.mxu0 %v235
    %289 = vmatprep.subr.mxu0 0.0
    %290 = vmatpush1.msra.mxu0 0.0
    %291 = vmatprep.subr.mxu0 0.0
    %292 = vmatpush1.msra.mxu0 0.0
    %293 = vmatprep.subr.mxu0 0.0
    %294 = vmatpush1.msra.mxu0 0.0
    %295 = vmatprep.subr.mxu0 0.0
    %296 = vmatpush1.msra.mxu0 0.0
    %297 = vmatprep.subr.mxu0 0.0
    %298 = vmatpush1.msra.mxu0 0.0
    %299 = vmatprep.subr.mxu0 0.0
    %300 = vmatpush1.msra.mxu0 0.0
    %301 = vmatprep.subr.mxu0 0.0
    %302 = vmatpush1.msra.mxu0 0.0
    %303 = vmatprep.subr.mxu0 0.0
    %304 = vmatpush1.msra.mxu0 0.0
    %305 = vmatprep.subr.mxu0 0.0
    %306 = vmatpush1.msra.mxu0 0.0
    %307 = vmatprep.subr.mxu0 0.0
    %308 = vmatpush1.msra.mxu0 0.0
    %309 = vmatprep.subr.mxu0 0.0
    %310 = vmatpush1.msra.mxu0 0.0
    %311 = vmatprep.subr.mxu0 0.0
    %312 = vmatpush1.msra.mxu0 0.0
    %313 = vmatprep.subr.mxu0 0.0
    %314 = vmatpush1.msra.mxu0 0.0
    %315 = vmatprep.subr.mxu0 0.0
    %316 = vmatpush1.msra.mxu0 0.0
    %317 = vmatprep.subr.mxu0 0.0
    %318 = vmatpush1.msra.mxu0 0.0
    %319 = vmatprep.subr.mxu0 0.0
    %320 = vmatpush1.msra.mxu0 0.0
    %321 = vmatprep.subr.mxu0 0.0
    %322 = vmatpush1.msra.mxu0 0.0
    %323 = vmatprep.subr.mxu0 0.0
    %324 = vmatpush1.msra.mxu0 0.0
    %325 = vmatprep.subr.mxu0 0.0
    %326 = vmatpush1.msra.mxu0 0.0
    %327 = vmatprep.subr.mxu0 0.0
    %328 = vmatpush1.msra.mxu0 0.0
    %329 = vmatprep.subr.mxu0 0.0
    %330 = vmatpush1.msra.mxu0 0.0
    %331 = vmatprep.subr.mxu0 0.0
    %332 = vmatpush1.msra.mxu0 0.0
    %333 = vmatprep.subr.mxu0 0.0
    %334 = vmatpush1.msra.mxu0 0.0
    %335 = vmatprep.subr.mxu0 0.0
    %336 = vmatpush1.msra.mxu0 0.0
    %337 = vmatprep.mubr.f32.mxu0 0.0
    %338 = vmatmul.mubr.f32.gmra.mrb[0].mxu0 %v271
    %v339 = vpop.f32.mrb[0].mxu0
    %v340 = vadd.f32 %v265, %v339
    %v341 = vpop.f32.mrb[0].mxu0
    %v342 = vadd.f32 %v266, %v341
    %343 = vdwg.mxu0
    %v344 = vxor.u32 %v340, 2147483648
    %v345 = vxor.u32 %v342, 2147483648
    %v346 = vmul.f32 %v344, 1.442695
    %v347 = vpow.pop %v346
    %v348 = vmul.f32 %v345, 1.442695
    %v349 = vpow.pop %v348
    %v350 = vadd.f32 %v347, 1.0
    %v351 = vadd.f32 %v349, 1.0
    %v352 = vrcp.pop %v350
    %v353 = vmul.f32 1.0, %v352
    %v354 = vrcp.pop %v351
    %v355 = vmul.f32 1.0, %v354
    %v356 = vtanh.pop %v342
    %358 = vrot.lane.b32.xlu0 %v258, 64
    %v359 = vpop.permute.xlu0 %358
    %v361 = vmul.f32 %v353, %v359
    %v362 = vmul.f32 %v353, %v356
    %364 = vrot.lane.b32.xlu0 %v362, 64
    %v365 = vpop.permute.xlu0 %364
    %v367 = vadd.f32 %v361, %v365
    %v368 = vtanh.pop %v367
    %v369 = vmul.f32 %v355, %v368
    %371 = vrot.lane.b32.xlu0 %v369, 64
    %v372 = vpop.permute.xlu0 %371
    %374 = vst.msk [vmem:[#allocation3] sm:$0xff] %vm270, %v372
    %v375 = vld [vmem:[#allocation2 + $0x20] sm:$0xff]
    %v376 = vld [vmem:[#allocation2 + $0x28] sm:$0xff]
    %v377 = vsel %vm270, %v372, 0
    %379 = vmatprep.subr.mxu0 %v222
    %380 = vmatpush1.msra.mxu0 %v221
    %381 = vmatprep.subr.mxu0 %v224
    %382 = vmatpush1.msra.mxu0 %v223
    %383 = vmatprep.subr.mxu0 %v226
    %384 = vmatpush1.msra.mxu0 %v225
    %385 = vmatprep.subr.mxu0 %v228
    %386 = vmatpush1.msra.mxu0 %v227
    %387 = vmatprep.subr.mxu0 %v230
    %388 = vmatpush1.msra.mxu0 %v229
    %389 = vmatprep.subr.mxu0 %v232
    %390 = vmatpush1.msra.mxu0 %v231
    %391 = vmatprep.subr.mxu0 %v234
    %392 = vmatpush1.msra.mxu0 %v233
    %393 = vmatprep.subr.mxu0 %v236
    %394 = vmatpush1.msra.mxu0 %v235
    %395 = vmatprep.subr.mxu0 0.0
    %396 = vmatpush1.msra.mxu0 0.0
    %397 = vmatprep.subr.mxu0 0.0
    %398 = vmatpush1.msra.mxu0 0.0
    %399 = vmatprep.subr.mxu0 0.0
    %400 = vmatpush1.msra.mxu0 0.0
    %401 = vmatprep.subr.mxu0 0.0
    %402 = vmatpush1.msra.mxu0 0.0
    %403 = vmatprep.subr.mxu0 0.0
    %404 = vmatpush1.msra.mxu0 0.0
    %405 = vmatprep.subr.mxu0 0.0
    %406 = vmatpush1.msra.mxu0 0.0
    %407 = vmatprep.subr.mxu0 0.0
    %408 = vmatpush1.msra.mxu0 0.0
    %409 = vmatprep.subr.mxu0 0.0
    %410 = vmatpush1.msra.mxu0 0.0
    %411 = vmatprep.subr.mxu0 0.0
    %412 = vmatpush1.msra.mxu0 0.0
    %413 = vmatprep.subr.mxu0 0.0
    %414 = vmatpush1.msra.mxu0 0.0
    %415 = vmatprep.subr.mxu0 0.0
    %416 = vmatpush1.msra.mxu0 0.0
    %417 = vmatprep.subr.mxu0 0.0
    %418 = vmatpush1.msra.mxu0 0.0
    %419 = vmatprep.subr.mxu0 0.0
    %420 = vmatpush1.msra.mxu0 0.0
    %421 = vmatprep.subr.mxu0 0.0
    %422 = vmatpush1.msra.mxu0 0.0
    %423 = vmatprep.subr.mxu0 0.0
    %424 = vmatpush1.msra.mxu0 0.0
    %425 = vmatprep.subr.mxu0 0.0
    %426 = vmatpush1.msra.mxu0 0.0
    %427 = vmatprep.subr.mxu0 0.0
    %428 = vmatpush1.msra.mxu0 0.0
    %429 = vmatprep.subr.mxu0 0.0
    %430 = vmatpush1.msra.mxu0 0.0
    %431 = vmatprep.subr.mxu0 0.0
    %432 = vmatpush1.msra.mxu0 0.0
    %433 = vmatprep.subr.mxu0 0.0
    %434 = vmatpush1.msra.mxu0 0.0
    %435 = vmatprep.subr.mxu0 0.0
    %436 = vmatpush1.msra.mxu0 0.0
    %437 = vmatprep.subr.mxu0 0.0
    %438 = vmatpush1.msra.mxu0 0.0
    %439 = vmatprep.subr.mxu0 0.0
    %440 = vmatpush1.msra.mxu0 0.0
    %441 = vmatprep.subr.mxu0 0.0
    %442 = vmatpush1.msra.mxu0 0.0
    %443 = vmatprep.mubr.f32.mxu0 0.0
    %444 = vmatmul.mubr.f32.gmra.mrb[0].mxu0 %v377
    %v445 = vpop.f32.mrb[0].mxu0
    %v446 = vadd.f32 %v375, %v445
    %v447 = vpop.f32.mrb[0].mxu0
    %v448 = vadd.f32 %v376, %v447
    %449 = vdwg.mxu0
    %v450 = vxor.u32 %v446, 2147483648
    %v451 = vxor.u32 %v448, 2147483648
    %v452 = vmul.f32 %v450, 1.442695
    %v453 = vpow.pop %v452
    %v454 = vmul.f32 %v451, 1.442695
    %v455 = vpow.pop %v454
    %v456 = vadd.f32 %v453, 1.0
    %v457 = vadd.f32 %v455, 1.0
    %v458 = vrcp.pop %v456
    %v459 = vmul.f32 1.0, %v458
    %v460 = vrcp.pop %v457
    %v461 = vmul.f32 1.0, %v460
    %v462 = vtanh.pop %v448
    %v463 = vmul.f32 %v459, %v367
    %v464 = vmul.f32 %v459, %v462
    %466 = vrot.lane.b32.xlu0 %v464, 64
    %v467 = vpop.permute.xlu0 %466
    %v469 = vadd.f32 %v463, %v467
    %v470 = vtanh.pop %v469
    %v471 = vmul.f32 %v461, %v470
    %473 = vrot.lane.b32.xlu0 %v471, 64
    %v474 = vpop.permute.xlu0 %473
    %476 = vst.msk [vmem:[#allocation3 + $0x8] sm:$0xff] %vm270, %v474
    %v477 = vld [vmem:[#allocation2 + $0x30] sm:$0xff]
    %v478 = vld [vmem:[#allocation2 + $0x38] sm:$0xff]
    %v479 = vsel %vm270, %v474, 0
    %481 = vmatprep.subr.mxu0 %v222
    %482 = vmatpush1.msra.mxu0 %v221
    %483 = vmatprep.subr.mxu0 %v224
    %484 = vmatpush1.msra.mxu0 %v223
    %485 = vmatprep.subr.mxu0 %v226
    %486 = vmatpush1.msra.mxu0 %v225
    %487 = vmatprep.subr.mxu0 %v228
    %488 = vmatpush1.msra.mxu0 %v227
    %489 = vmatprep.subr.mxu0 %v230
    %490 = vmatpush1.msra.mxu0 %v229
    %491 = vmatprep.subr.mxu0 %v232
    %492 = vmatpush1.msra.mxu0 %v231
    %493 = vmatprep.subr.mxu0 %v234
    %494 = vmatpush1.msra.mxu0 %v233
    %495 = vmatprep.subr.mxu0 %v236
    %496 = vmatpush1.msra.mxu0 %v235
    %497 = vmatprep.subr.mxu0 0.0
    %498 = vmatpush1.msra.mxu0 0.0
    %499 = vmatprep.subr.mxu0 0.0
    %500 = vmatpush1.msra.mxu0 0.0
    %501 = vmatprep.subr.mxu0 0.0
    %502 = vmatpush1.msra.mxu0 0.0
    %503 = vmatprep.subr.mxu0 0.0
    %504 = vmatpush1.msra.mxu0 0.0
    %505 = vmatprep.subr.mxu0 0.0
    %506 = vmatpush1.msra.mxu0 0.0
    %507 = vmatprep.subr.mxu0 0.0
    %508 = vmatpush1.msra.mxu0 0.0
    %509 = vmatprep.subr.mxu0 0.0
    %510 = vmatpush1.msra.mxu0 0.0
    %511 = vmatprep.subr.mxu0 0.0
    %512 = vmatpush1.msra.mxu0 0.0
    %513 = vmatprep.subr.mxu0 0.0
    %514 = vmatpush1.msra.mxu0 0.0
    %515 = vmatprep.subr.mxu0 0.0
    %516 = vmatpush1.msra.mxu0 0.0
    %517 = vmatprep.subr.mxu0 0.0
    %518 = vmatpush1.msra.mxu0 0.0
    %519 = vmatprep.subr.mxu0 0.0
    %520 = vmatpush1.msra.mxu0 0.0
    %521 = vmatprep.subr.mxu0 0.0
    %522 = vmatpush1.msra.mxu0 0.0
    %523 = vmatprep.subr.mxu0 0.0
    %524 = vmatpush1.msra.mxu0 0.0
    %525 = vmatprep.subr.mxu0 0.0
    %526 = vmatpush1.msra.mxu0 0.0
    %527 = vmatprep.subr.mxu0 0.0
    %528 = vmatpush1.msra.mxu0 0.0
    %529 = vmatprep.subr.mxu0 0.0
    %530 = vmatpush1.msra.mxu0 0.0
    %531 = vmatprep.subr.mxu0 0.0
    %532 = vmatpush1.msra.mxu0 0.0
    %533 = vmatprep.subr.mxu0 0.0
    %534 = vmatpush1.msra.mxu0 0.0
    %535 = vmatprep.subr.mxu0 0.0
    %536 = vmatpush1.msra.mxu0 0.0
    %537 = vmatprep.subr.mxu0 0.0
    %538 = vmatpush1.msra.mxu0 0.0
    %539 = vmatprep.subr.mxu0 0.0
    %540 = vmatpush1.msra.mxu0 0.0
    %541 = vmatprep.subr.mxu0 0.0
    %542 = vmatpush1.msra.mxu0 0.0
    %543 = vmatprep.subr.mxu0 0.0
    %544 = vmatpush1.msra.mxu0 0.0
    %545 = vmatprep.mubr.f32.mxu0 0.0
    %546 = vmatmul.mubr.f32.gmra.mrb[0].mxu0 %v479
    %v547 = vpop.f32.mrb[0].mxu0
    %v548 = vadd.f32 %v477, %v547
    %v549 = vpop.f32.mrb[0].mxu0
    %v550 = vadd.f32 %v478, %v549
    %551 = vdwg.mxu0
    %v552 = vxor.u32 %v548, 2147483648
    %v553 = vxor.u32 %v550, 2147483648
    %v554 = vmul.f32 %v552, 1.442695
    %v555 = vpow.pop %v554
    %v556 = vmul.f32 %v553, 1.442695
    %v557 = vpow.pop %v556
    %v558 = vadd.f32 %v555, 1.0
    %v559 = vadd.f32 %v557, 1.0
    %v560 = vrcp.pop %v558
    %v561 = vmul.f32 1.0, %v560
    %v562 = vrcp.pop %v559
    %v563 = vmul.f32 1.0, %v562
    %v564 = vtanh.pop %v550
    %v565 = vmul.f32 %v561, %v469
    %v566 = vmul.f32 %v561, %v564
    %568 = vrot.lane.b32.xlu0 %v566, 64
    %v569 = vpop.permute.xlu0 %568
    %v571 = vadd.f32 %v565, %v569
    %v572 = vtanh.pop %v571
    %v573 = vmul.f32 %v563, %v572
    %575 = vrot.lane.b32.xlu0 %v573, 64
    %v576 = vpop.permute.xlu0 %575
    %578 = vst.msk [vmem:[#allocation3 + $0x10] sm:$0xff] %vm270, %v576
    %v579 = vld [vmem:[#allocation2 + $0x40] sm:$0xff]
    %v580 = vld [vmem:[#allocation2 + $0x48] sm:$0xff]
    %v581 = vsel %vm270, %v576, 0
    %583 = vmatprep.subr.mxu0 %v222
    %584 = vmatpush1.msra.mxu0 %v221
    %585 = vmatprep.subr.mxu0 %v224
    %586 = vmatpush1.msra.mxu0 %v223
    %587 = vmatprep.subr.mxu0 %v226
    %588 = vmatpush1.msra.mxu0 %v225
    %589 = vmatprep.subr.mxu0 %v228
    %590 = vmatpush1.msra.mxu0 %v227
    %591 = vmatprep.subr.mxu0 %v230
    %592 = vmatpush1.msra.mxu0 %v229
    %593 = vmatprep.subr.mxu0 %v232
    %594 = vmatpush1.msra.mxu0 %v231
    %595 = vmatprep.subr.mxu0 %v234
    %596 = vmatpush1.msra.mxu0 %v233
    %597 = vmatprep.subr.mxu0 %v236
    %598 = vmatpush1.msra.mxu0 %v235
    %599 = vmatprep.subr.mxu0 0.0
    %600 = vmatpush1.msra.mxu0 0.0
    %601 = vmatprep.subr.mxu0 0.0
    %602 = vmatpush1.msra.mxu0 0.0
    %603 = vmatprep.subr.mxu0 0.0
    %604 = vmatpush1.msra.mxu0 0.0
    %605 = vmatprep.subr.mxu0 0.0
    %606 = vmatpush1.msra.mxu0 0.0
    %607 = vmatprep.subr.mxu0 0.0
    %608 = vmatpush1.msra.mxu0 0.0
    %609 = vmatprep.subr.mxu0 0.0
    %610 = vmatpush1.msra.mxu0 0.0
    %611 = vmatprep.subr.mxu0 0.0
    %612 = vmatpush1.msra.mxu0 0.0
    %613 = vmatprep.subr.mxu0 0.0
    %614 = vmatpush1.msra.mxu0 0.0
    %615 = vmatprep.subr.mxu0 0.0
    %616 = vmatpush1.msra.mxu0 0.0
    %617 = vmatprep.subr.mxu0 0.0
    %618 = vmatpush1.msra.mxu0 0.0
    %619 = vmatprep.subr.mxu0 0.0
    %620 = vmatpush1.msra.mxu0 0.0
    %621 = vmatprep.subr.mxu0 0.0
    %622 = vmatpush1.msra.mxu0 0.0
    %623 = vmatprep.subr.mxu0 0.0
    %624 = vmatpush1.msra.mxu0 0.0
    %625 = vmatprep.subr.mxu0 0.0
    %626 = vmatpush1.msra.mxu0 0.0
    %627 = vmatprep.subr.mxu0 0.0
    %628 = vmatpush1.msra.mxu0 0.0
    %629 = vmatprep.subr.mxu0 0.0
    %630 = vmatpush1.msra.mxu0 0.0
    %631 = vmatprep.subr.mxu0 0.0
    %632 = vmatpush1.msra.mxu0 0.0
    %633 = vmatprep.subr.mxu0 0.0
    %634 = vmatpush1.msra.mxu0 0.0
    %635 = vmatprep.subr.mxu0 0.0
    %636 = vmatpush1.msra.mxu0 0.0
    %637 = vmatprep.subr.mxu0 0.0
    %638 = vmatpush1.msra.mxu0 0.0
    %639 = vmatprep.subr.mxu0 0.0
    %640 = vmatpush1.msra.mxu0 0.0
    %641 = vmatprep.subr.mxu0 0.0
    %642 = vmatpush1.msra.mxu0 0.0
    %643 = vmatprep.subr.mxu0 0.0
    %644 = vmatpush1.msra.mxu0 0.0
    %645 = vmatprep.subr.mxu0 0.0
    %646 = vmatpush1.msra.mxu0 0.0
    %647 = vmatprep.mubr.f32.mxu0 0.0
    %648 = vmatmul.mubr.f32.gmra.mrb[0].mxu0 %v581
    %v649 = vpop.f32.mrb[0].mxu0
    %v650 = vadd.f32 %v579, %v649
    %v651 = vpop.f32.mrb[0].mxu0
    %v652 = vadd.f32 %v580, %v651
    %653 = vdwg.mxu0
    %v654 = vxor.u32 %v650, 2147483648
    %v655 = vxor.u32 %v652, 2147483648
    %v656 = vmul.f32 %v654, 1.442695
    %v657 = vpow.pop %v656
    %v658 = vmul.f32 %v655, 1.442695
    %v659 = vpow.pop %v658
    %v660 = vadd.f32 %v657, 1.0
    %v661 = vadd.f32 %v659, 1.0
    %v662 = vrcp.pop %v660
    %v663 = vmul.f32 1.0, %v662
    %v664 = vrcp.pop %v661
    %v665 = vmul.f32 1.0, %v664
    %v666 = vtanh.pop %v652
    %v667 = vmul.f32 %v663, %v571
    %v668 = vmul.f32 %v663, %v666
    %670 = vrot.lane.b32.xlu0 %v668, 64
    %v671 = vpop.permute.xlu0 %670
    %v673 = vadd.f32 %v667, %v671
    %v674 = vtanh.pop %v673
    %v675 = vmul.f32 %v665, %v674
    %677 = vrot.lane.b32.xlu0 %v675, 64
    %v678 = vpop.permute.xlu0 %677
    %680 = vst.msk [vmem:[#allocation3 + $0x18] sm:$0xff] %vm270, %v678
    %v681 = vld [vmem:[#allocation2 + $0x50] sm:$0xff]
    %v682 = vld [vmem:[#allocation2 + $0x58] sm:$0xff]
    %v683 = vsel %vm270, %v678, 0
    %685 = vmatprep.subr.mxu0 %v222
    %686 = vmatpush1.msra.mxu0 %v221
    %687 = vmatprep.subr.mxu0 %v224
    %688 = vmatpush1.msra.mxu0 %v223
    %689 = vmatprep.subr.mxu0 %v226
    %690 = vmatpush1.msra.mxu0 %v225
    %691 = vmatprep.subr.mxu0 %v228
    %692 = vmatpush1.msra.mxu0 %v227
    %693 = vmatprep.subr.mxu0 %v230
    %694 = vmatpush1.msra.mxu0 %v229
    %695 = vmatprep.subr.mxu0 %v232
    %696 = vmatpush1.msra.mxu0 %v231
    %697 = vmatprep.subr.mxu0 %v234
    %698 = vmatpush1.msra.mxu0 %v233
    %699 = vmatprep.subr.mxu0 %v236
    %700 = vmatpush1.msra.mxu0 %v235
    %701 = vmatprep.subr.mxu0 0.0
    %702 = vmatpush1.msra.mxu0 0.0
    %703 = vmatprep.subr.mxu0 0.0
    %704 = vmatpush1.msra.mxu0 0.0
    %705 = vmatprep.subr.mxu0 0.0
    %706 = vmatpush1.msra.mxu0 0.0
    %707 = vmatprep.subr.mxu0 0.0
    %708 = vmatpush1.msra.mxu0 0.0
    %709 = vmatprep.subr.mxu0 0.0
    %710 = vmatpush1.msra.mxu0 0.0
    %711 = vmatprep.subr.mxu0 0.0
    %712 = vmatpush1.msra.mxu0 0.0
    %713 = vmatprep.subr.mxu0 0.0
    %714 = vmatpush1.msra.mxu0 0.0
    %715 = vmatprep.subr.mxu0 0.0
    %716 = vmatpush1.msra.mxu0 0.0
    %717 = vmatprep.subr.mxu0 0.0
    %718 = vmatpush1.msra.mxu0 0.0
    %719 = vmatprep.subr.mxu0 0.0
    %720 = vmatpush1.msra.mxu0 0.0
    %721 = vmatprep.subr.mxu0 0.0
    %722 = vmatpush1.msra.mxu0 0.0
    %723 = vmatprep.subr.mxu0 0.0
    %724 = vmatpush1.msra.mxu0 0.0
    %725 = vmatprep.subr.mxu0 0.0
    %726 = vmatpush1.msra.mxu0 0.0
    %727 = vmatprep.subr.mxu0 0.0
    %728 = vmatpush1.msra.mxu0 0.0
    %729 = vmatprep.subr.mxu0 0.0
    %730 = vmatpush1.msra.mxu0 0.0
    %731 = vmatprep.subr.mxu0 0.0
    %732 = vmatpush1.msra.mxu0 0.0
    %733 = vmatprep.subr.mxu0 0.0
    %734 = vmatpush1.msra.mxu0 0.0
    %735 = vmatprep.subr.mxu0 0.0
    %736 = vmatpush1.msra.mxu0 0.0
    %737 = vmatprep.subr.mxu0 0.0
    %738 = vmatpush1.msra.mxu0 0.0
    %739 = vmatprep.subr.mxu0 0.0
    %740 = vmatpush1.msra.mxu0 0.0
    %741 = vmatprep.subr.mxu0 0.0
    %742 = vmatpush1.msra.mxu0 0.0
    %743 = vmatprep.subr.mxu0 0.0
    %744 = vmatpush1.msra.mxu0 0.0
    %745 = vmatprep.subr.mxu0 0.0
    %746 = vmatpush1.msra.mxu0 0.0
    %747 = vmatprep.subr.mxu0 0.0
    %748 = vmatpush1.msra.mxu0 0.0
    %749 = vmatprep.mubr.f32.mxu0 0.0
    %750 = vmatmul.mubr.f32.gmra.mrb[0].mxu0 %v683
    %v751 = vpop.f32.mrb[0].mxu0
    %v752 = vadd.f32 %v681, %v751
    %v753 = vpop.f32.mrb[0].mxu0
    %v754 = vadd.f32 %v682, %v753
    %755 = vdwg.mxu0
    %v756 = vxor.u32 %v752, 2147483648
    %v757 = vxor.u32 %v754, 2147483648
    %v758 = vmul.f32 %v756, 1.442695
    %v759 = vpow.pop %v758
    %v760 = vmul.f32 %v757, 1.442695
    %v761 = vpow.pop %v760
    %v762 = vadd.f32 %v759, 1.0
    %v763 = vadd.f32 %v761, 1.0
    %v764 = vrcp.pop %v762
    %v765 = vmul.f32 1.0, %v764
    %v766 = vrcp.pop %v763
    %v767 = vmul.f32 1.0, %v766
    %v768 = vtanh.pop %v754
    %v769 = vmul.f32 %v765, %v673
    %v770 = vmul.f32 %v765, %v768
    %772 = vrot.lane.b32.xlu0 %v770, 64
    %v773 = vpop.permute.xlu0 %772
    %v775 = vadd.f32 %v769, %v773
    %v776 = vtanh.pop %v775
    %v777 = vmul.f32 %v767, %v776
    %779 = vrot.lane.b32.xlu0 %v777, 64
    %v780 = vpop.permute.xlu0 %779
    %782 = vst.msk [vmem:[#allocation3 + $0x20] sm:$0xff] %vm270, %v780
    %v783 = vld [vmem:[#allocation2 + $0x60] sm:$0xff]
    %v784 = vld [vmem:[#allocation2 + $0x68] sm:$0xff]
    %v785 = vsel %vm270, %v780, 0
    %787 = vmatprep.subr.mxu0 %v222
    %788 = vmatpush1.msra.mxu0 %v221
    %789 = vmatprep.subr.mxu0 %v224
    %790 = vmatpush1.msra.mxu0 %v223
    %791 = vmatprep.subr.mxu0 %v226
    %792 = vmatpush1.msra.mxu0 %v225
    %793 = vmatprep.subr.mxu0 %v228
    %794 = vmatpush1.msra.mxu0 %v227
    %795 = vmatprep.subr.mxu0 %v230
    %796 = vmatpush1.msra.mxu0 %v229
    %797 = vmatprep.subr.mxu0 %v232
    %798 = vmatpush1.msra.mxu0 %v231
    %799 = vmatprep.subr.mxu0 %v234
    %800 = vmatpush1.msra.mxu0 %v233
    %801 = vmatprep.subr.mxu0 %v236
    %802 = vmatpush1.msra.mxu0 %v235
    %803 = vmatprep.subr.mxu0 0.0
    %804 = vmatpush1.msra.mxu0 0.0
    %805 = vmatprep.subr.mxu0 0.0
    %806 = vmatpush1.msra.mxu0 0.0
    %807 = vmatprep.subr.mxu0 0.0
    %808 = vmatpush1.msra.mxu0 0.0
    %809 = vmatprep.subr.mxu0 0.0
    %810 = vmatpush1.msra.mxu0 0.0
    %811 = vmatprep.subr.mxu0 0.0
    %812 = vmatpush1.msra.mxu0 0.0
    %813 = vmatprep.subr.mxu0 0.0
    %814 = vmatpush1.msra.mxu0 0.0
    %815 = vmatprep.subr.mxu0 0.0
    %816 = vmatpush1.msra.mxu0 0.0
    %817 = vmatprep.subr.mxu0 0.0
    %818 = vmatpush1.msra.mxu0 0.0
    %819 = vmatprep.subr.mxu0 0.0
    %820 = vmatpush1.msra.mxu0 0.0
    %821 = vmatprep.subr.mxu0 0.0
    %822 = vmatpush1.msra.mxu0 0.0
    %823 = vmatprep.subr.mxu0 0.0
    %824 = vmatpush1.msra.mxu0 0.0
    %825 = vmatprep.subr.mxu0 0.0
    %826 = vmatpush1.msra.mxu0 0.0
    %827 = vmatprep.subr.mxu0 0.0
    %828 = vmatpush1.msra.mxu0 0.0
    %829 = vmatprep.subr.mxu0 0.0
    %830 = vmatpush1.msra.mxu0 0.0
    %831 = vmatprep.subr.mxu0 0.0
    %832 = vmatpush1.msra.mxu0 0.0
    %833 = vmatprep.subr.mxu0 0.0
    %834 = vmatpush1.msra.mxu0 0.0
    %835 = vmatprep.subr.mxu0 0.0
    %836 = vmatpush1.msra.mxu0 0.0
    %837 = vmatprep.subr.mxu0 0.0
    %838 = vmatpush1.msra.mxu0 0.0
    %839 = vmatprep.subr.mxu0 0.0
    %840 = vmatpush1.msra.mxu0 0.0
    %841 = vmatprep.subr.mxu0 0.0
    %842 = vmatpush1.msra.mxu0 0.0
    %843 = vmatprep.subr.mxu0 0.0
    %844 = vmatpush1.msra.mxu0 0.0
    %845 = vmatprep.subr.mxu0 0.0
    %846 = vmatpush1.msra.mxu0 0.0
    %847 = vmatprep.subr.mxu0 0.0
    %848 = vmatpush1.msra.mxu0 0.0
    %849 = vmatprep.subr.mxu0 0.0
    %850 = vmatpush1.msra.mxu0 0.0
    %851 = vmatprep.mubr.f32.mxu0 0.0
    %852 = vmatmul.mubr.f32.gmra.mrb[0].mxu0 %v785
    %v853 = vpop.f32.mrb[0].mxu0
    %v854 = vadd.f32 %v783, %v853
    %v855 = vpop.f32.mrb[0].mxu0
    %v856 = vadd.f32 %v784, %v855
    %857 = vdwg.mxu0
    %v858 = vxor.u32 %v854, 2147483648
    %v859 = vxor.u32 %v856, 2147483648
    %v860 = vmul.f32 %v858, 1.442695
    %v861 = vpow.pop %v860
    %v862 = vmul.f32 %v859, 1.442695
    %v863 = vpow.pop %v862
    %v864 = vadd.f32 %v861, 1.0
    %v865 = vadd.f32 %v863, 1.0
    %v866 = vrcp.pop %v864
    %v867 = vmul.f32 1.0, %v866
    %v868 = vrcp.pop %v865
    %v869 = vmul.f32 1.0, %v868
    %v870 = vtanh.pop %v856
    %v871 = vmul.f32 %v867, %v775
    %v872 = vmul.f32 %v867, %v870
    %874 = vrot.lane.b32.xlu0 %v872, 64
    %v875 = vpop.permute.xlu0 %874
    %v877 = vadd.f32 %v871, %v875
    %v878 = vtanh.pop %v877
    %v879 = vmul.f32 %v869, %v878
    %881 = vrot.lane.b32.xlu0 %v879, 64
    %v882 = vpop.permute.xlu0 %881
    %884 = vst.msk [vmem:[#allocation3 + $0x28] sm:$0xff] %vm270, %v882
    %v885 = vld [vmem:[#allocation2 + $0x70] sm:$0xff]
    %v886 = vld [vmem:[#allocation2 + $0x78] sm:$0xff]
    %v887 = vsel %vm270, %v882, 0
    %889 = vmatprep.subr.mxu0 %v222
    %890 = vmatpush1.msra.mxu0 %v221
    %891 = vmatprep.subr.mxu0 %v224
    %892 = vmatpush1.msra.mxu0 %v223
    %893 = vmatprep.subr.mxu0 %v226
    %894 = vmatpush1.msra.mxu0 %v225
    %895 = vmatprep.subr.mxu0 %v228
    %896 = vmatpush1.msra.mxu0 %v227
    %897 = vmatprep.subr.mxu0 %v230
    %898 = vmatpush1.msra.mxu0 %v229
    %899 = vmatprep.subr.mxu0 %v232
    %900 = vmatpush1.msra.mxu0 %v231
    %901 = vmatprep.subr.mxu0 %v234
    %902 = vmatpush1.msra.mxu0 %v233
    %903 = vmatprep.subr.mxu0 %v236
    %904 = vmatpush1.msra.mxu0 %v235
    %905 = vmatprep.subr.mxu0 0.0
    %906 = vmatpush1.msra.mxu0 0.0
    %907 = vmatprep.subr.mxu0 0.0
    %908 = vmatpush1.msra.mxu0 0.0
    %909 = vmatprep.subr.mxu0 0.0
    %910 = vmatpush1.msra.mxu0 0.0
    %911 = vmatprep.subr.mxu0 0.0
    %912 = vmatpush1.msra.mxu0 0.0
    %913 = vmatprep.subr.mxu0 0.0
    %914 = vmatpush1.msra.mxu0 0.0
    %915 = vmatprep.subr.mxu0 0.0
    %916 = vmatpush1.msra.mxu0 0.0
    %917 = vmatprep.subr.mxu0 0.0
    %918 = vmatpush1.msra.mxu0 0.0
    %919 = vmatprep.subr.mxu0 0.0
    %920 = vmatpush1.msra.mxu0 0.0
    %921 = vmatprep.subr.mxu0 0.0
    %922 = vmatpush1.msra.mxu0 0.0
    %923 = vmatprep.subr.mxu0 0.0
    %924 = vmatpush1.msra.mxu0 0.0
    %925 = vmatprep.subr.mxu0 0.0
    %926 = vmatpush1.msra.mxu0 0.0
    %927 = vmatprep.subr.mxu0 0.0
    %928 = vmatpush1.msra.mxu0 0.0
    %929 = vmatprep.subr.mxu0 0.0
    %930 = vmatpush1.msra.mxu0 0.0
    %931 = vmatprep.subr.mxu0 0.0
    %932 = vmatpush1.msra.mxu0 0.0
    %933 = vmatprep.subr.mxu0 0.0
    %934 = vmatpush1.msra.mxu0 0.0
    %935 = vmatprep.subr.mxu0 0.0
    %936 = vmatpush1.msra.mxu0 0.0
    %937 = vmatprep.subr.mxu0 0.0
    %938 = vmatpush1.msra.mxu0 0.0
    %939 = vmatprep.subr.mxu0 0.0
    %940 = vmatpush1.msra.mxu0 0.0
    %941 = vmatprep.subr.mxu0 0.0
    %942 = vmatpush1.msra.mxu0 0.0
    %943 = vmatprep.subr.mxu0 0.0
    %944 = vmatpush1.msra.mxu0 0.0
    %945 = vmatprep.subr.mxu0 0.0
    %946 = vmatpush1.msra.mxu0 0.0
    %947 = vmatprep.subr.mxu0 0.0
    %948 = vmatpush1.msra.mxu0 0.0
    %949 = vmatprep.subr.mxu0 0.0
    %950 = vmatpush1.msra.mxu0 0.0
    %951 = vmatprep.subr.mxu0 0.0
    %952 = vmatpush1.msra.mxu0 0.0
    %953 = vmatprep.mubr.f32.mxu0 0.0
    %954 = vmatmul.mubr.f32.gmra.mrb[0].mxu0 %v887
    %v955 = vpop.f32.mrb[0].mxu0
    %v956 = vadd.f32 %v885, %v955
    %v957 = vpop.f32.mrb[0].mxu0
    %v958 = vadd.f32 %v886, %v957
    %959 = vdwg.mxu0
    %v960 = vxor.u32 %v956, 2147483648
    %v961 = vxor.u32 %v958, 2147483648
    %v962 = vmul.f32 %v960, 1.442695
    %v963 = vpow.pop %v962
    %v964 = vmul.f32 %v961, 1.442695
    %v965 = vpow.pop %v964
    %v966 = vadd.f32 %v963, 1.0
    %v967 = vadd.f32 %v965, 1.0
    %v968 = vrcp.pop %v966
    %v969 = vmul.f32 1.0, %v968
    %v970 = vrcp.pop %v967
    %v971 = vmul.f32 1.0, %v970
    %v972 = vtanh.pop %v958
    %v973 = vmul.f32 %v969, %v877
    %v974 = vmul.f32 %v969, %v972
    %976 = vrot.lane.b32.xlu0 %v974, 64
    %v977 = vpop.permute.xlu0 %976
    %v979 = vadd.f32 %v973, %v977
    %v980 = vtanh.pop %v979
    %v981 = vmul.f32 %v971, %v980
    %983 = vrot.lane.b32.xlu0 %v981, 64
    %v984 = vpop.permute.xlu0 %983
    %986 = vst.msk [vmem:[#allocation3 + $0x30] sm:$0xff] %vm270, %v984
    %v987 = vld [vmem:[#allocation2 + $0x80] sm:$0xff]
    %v988 = vld [vmem:[#allocation2 + $0x88] sm:$0xff]
    %v989 = vsel %vm270, %v984, 0
    %991 = vmatprep.subr.mxu0 %v222
    %992 = vmatpush1.msra.mxu0 %v221
    %993 = vmatprep.subr.mxu0 %v224
    %994 = vmatpush1.msra.mxu0 %v223
    %995 = vmatprep.subr.mxu0 %v226
    %996 = vmatpush1.msra.mxu0 %v225
    %997 = vmatprep.subr.mxu0 %v228
    %998 = vmatpush1.msra.mxu0 %v227
    %999 = vmatprep.subr.mxu0 %v230
    %1000 = vmatpush1.msra.mxu0 %v229
    %1001 = vmatprep.subr.mxu0 %v232
    %1002 = vmatpush1.msra.mxu0 %v231
    %1003 = vmatprep.subr.mxu0 %v234
    %1004 = vmatpush1.msra.mxu0 %v233
    %1005 = vmatprep.subr.mxu0 %v236
    %1006 = vmatpush1.msra.mxu0 %v235
    %1007 = vmatprep.subr.mxu0 0.0
    %1008 = vmatpush1.msra.mxu0 0.0
    %1009 = vmatprep.subr.mxu0 0.0
    %1010 = vmatpush1.msra.mxu0 0.0
    %1011 = vmatprep.subr.mxu0 0.0
    %1012 = vmatpush1.msra.mxu0 0.0
    %1013 = vmatprep.subr.mxu0 0.0
    %1014 = vmatpush1.msra.mxu0 0.0
    %1015 = vmatprep.subr.mxu0 0.0
    %1016 = vmatpush1.msra.mxu0 0.0
    %1017 = vmatprep.subr.mxu0 0.0
    %1018 = vmatpush1.msra.mxu0 0.0
    %1019 = vmatprep.subr.mxu0 0.0
    %1020 = vmatpush1.msra.mxu0 0.0
    %1021 = vmatprep.subr.mxu0 0.0
    %1022 = vmatpush1.msra.mxu0 0.0
    %1023 = vmatprep.subr.mxu0 0.0
    %1024 = vmatpush1.msra.mxu0 0.0
    %1025 = vmatprep.subr.mxu0 0.0
    %1026 = vmatpush1.msra.mxu0 0.0
    %1027 = vmatprep.subr.mxu0 0.0
    %1028 = vmatpush1.msra.mxu0 0.0
    %1029 = vmatprep.subr.mxu0 0.0
    %1030 = vmatpush1.msra.mxu0 0.0
    %1031 = vmatprep.subr.mxu0 0.0
    %1032 = vmatpush1.msra.mxu0 0.0
    %1033 = vmatprep.subr.mxu0 0.0
    %1034 = vmatpush1.msra.mxu0 0.0
    %1035 = vmatprep.subr.mxu0 0.0
    %1036 = vmatpush1.msra.mxu0 0.0
    %1037 = vmatprep.subr.mxu0 0.0
    %1038 = vmatpush1.msra.mxu0 0.0
    %1039 = vmatprep.subr.mxu0 0.0
    %1040 = vmatpush1.msra.mxu0 0.0
    %1041 = vmatprep.subr.mxu0 0.0
    %1042 = vmatpush1.msra.mxu0 0.0
    %1043 = vmatprep.subr.mxu0 0.0
    %1044 = vmatpush1.msra.mxu0 0.0
    %1045 = vmatprep.subr.mxu0 0.0
    %1046 = vmatpush1.msra.mxu0 0.0
    %1047 = vmatprep.subr.mxu0 0.0
    %1048 = vmatpush1.msra.mxu0 0.0
    %1049 = vmatprep.subr.mxu0 0.0
    %1050 = vmatpush1.msra.mxu0 0.0
    %1051 = vmatprep.subr.mxu0 0.0
    %1052 = vmatpush1.msra.mxu0 0.0
    %1053 = vmatprep.subr.mxu0 0.0
    %1054 = vmatpush1.msra.mxu0 0.0
    %1055 = vmatprep.mubr.f32.mxu0 0.0
    %1056 = vmatmul.mubr.f32.gmra.mrb[0].mxu0 %v989
    %v1057 = vpop.f32.mrb[0].mxu0
    %v1058 = vadd.f32 %v987, %v1057
    %v1059 = vpop.f32.mrb[0].mxu0
    %v1060 = vadd.f32 %v988, %v1059
    %1061 = vdwg.mxu0
    %v1062 = vxor.u32 %v1058, 2147483648
    %v1063 = vxor.u32 %v1060, 2147483648
    %v1064 = vmul.f32 %v1062, 1.442695
    %v1065 = vpow.pop %v1064
    %v1066 = vmul.f32 %v1063, 1.442695
    %v1067 = vpow.pop %v1066
    %v1068 = vadd.f32 %v1065, 1.0
    %v1069 = vadd.f32 %v1067, 1.0
    %v1070 = vrcp.pop %v1068
    %v1071 = vmul.f32 1.0, %v1070
    %v1072 = vrcp.pop %v1069
    %v1073 = vmul.f32 1.0, %v1072
    %v1074 = vtanh.pop %v1060
    %v1075 = vmul.f32 %v1071, %v979
    %v1076 = vmul.f32 %v1071, %v1074
    %1078 = vrot.lane.b32.xlu0 %v1076, 64
    %v1079 = vpop.permute.xlu0 %1078
    %v1081 = vadd.f32 %v1075, %v1079
    %v1082 = vtanh.pop %v1081
    %v1083 = vmul.f32 %v1073, %v1082
    %1085 = vrot.lane.b32.xlu0 %v1083, 64
    %v1086 = vpop.permute.xlu0 %1085
    %1088 = vst.msk [vmem:[#allocation3 + $0x38] sm:$0xff] %vm270, %v1086
    %v1089 = vld [vmem:[#allocation4 + $0xd0] sm:$0xff]
    %v1090 = vld [vmem:[#allocation4 + $0xe0] sm:$0xff]
    %v1091 = vld [vmem:[#allocation4 + $0xf0] sm:$0xff]
    %v1092 = vld [vmem:[#allocation4 + $0x100] sm:$0xff]
    %v1093 = vld [vmem:[#allocation4 + $0x110] sm:$0xff]
    %v1094 = vld [vmem:[#allocation4 + $0x120] sm:$0xff]
    %v1095 = vld [vmem:[#allocation4 + $0x130] sm:$0xff]
    %v1096 = vld [vmem:[#allocation4 + $0x140] sm:$0xff]
    %v1097 = vld [vmem:[#allocation4 + $0x150] ss:$0 sm:$0xff]
    %v1098 = vld [vmem:[#allocation3] sm:$0xff]
    %v1099 = vld [vmem:[#allocation3 + $0x8] sm:$0xff]
    %v1100 = vld [vmem:[#allocation3 + $0x10] sm:$0xff]
    %v1101 = vld [vmem:[#allocation3 + $0x18] sm:$0xff]
    %v1102 = vld [vmem:[#allocation3 + $0x20] sm:$0xff]
    %v1103 = vld [vmem:[#allocation3 + $0x28] sm:$0xff]
    %v1104 = vld [vmem:[#allocation3 + $0x30] sm:$0xff]
    %v1105 = vld [vmem:[#allocation3 + $0x38] sm:$0xff]
    %v1107 = vsel %vm270, %v1098, 0
    %v1110 = vsel %vm270, %v1099, 0
    %v1113 = vsel %vm270, %v1100, 0
    %v1116 = vsel %vm270, %v1101, 0
    %v1119 = vsel %vm270, %v1102, 0
    %v1122 = vsel %vm270, %v1103, 0
    %v1125 = vsel %vm270, %v1104, 0
    %v1128 = vsel %vm270, %v1105, 0
    %1130 = vmatprep.subr.mxu0 0.0
    %1131 = vmatpush1.msra.mxu0 %v1089
    %1132 = vmatprep.subr.mxu0 0.0
    %1133 = vmatpush1.msra.mxu0 %v1090
    %1134 = vmatprep.subr.mxu0 0.0
    %1135 = vmatpush1.msra.mxu0 %v1091
    %1136 = vmatprep.subr.mxu0 0.0
    %1137 = vmatpush1.msra.mxu0 %v1092
    %1138 = vmatprep.subr.mxu0 0.0
    %1139 = vmatpush1.msra.mxu0 %v1093
    %1140 = vmatprep.subr.mxu0 0.0
    %1141 = vmatpush1.msra.mxu0 %v1094
    %1142 = vmatprep.subr.mxu0 0.0
    %1143 = vmatpush1.msra.mxu0 %v1095
    %1144 = vmatprep.subr.mxu0 0.0
    %1145 = vmatpush1.msra.mxu0 %v1096
    %1146 = vmatprep.subr.mxu0 0.0
    %1147 = vmatpush1.msra.mxu0 0.0
    %1148 = vmatprep.subr.mxu0 0.0
    %1149 = vmatpush1.msra.mxu0 0.0
    %1150 = vmatprep.subr.mxu0 0.0
    %1151 = vmatpush1.msra.mxu0 0.0
    %1152 = vmatprep.subr.mxu0 0.0
    %1153 = vmatpush1.msra.mxu0 0.0
    %1154 = vmatprep.subr.mxu0 0.0
    %1155 = vmatpush1.msra.mxu0 0.0
    %1156 = vmatprep.subr.mxu0 0.0
    %1157 = vmatpush1.msra.mxu0 0.0
    %1158 = vmatprep.subr.mxu0 0.0
    %1159 = vmatpush1.msra.mxu0 0.0
    %1160 = vmatprep.subr.mxu0 0.0
    %1161 = vmatpush1.msra.mxu0 0.0
    %1162 = vmatprep.subr.mxu0 0.0
    %1163 = vmatpush1.msra.mxu0 0.0
    %1164 = vmatprep.subr.mxu0 0.0
    %1165 = vmatpush1.msra.mxu0 0.0
    %1166 = vmatprep.subr.mxu0 0.0
    %1167 = vmatpush1.msra.mxu0 0.0
    %1168 = vmatprep.subr.mxu0 0.0
    %1169 = vmatpush1.msra.mxu0 0.0
    %1170 = vmatprep.subr.mxu0 0.0
    %1171 = vmatpush1.msra.mxu0 0.0
    %1172 = vmatprep.subr.mxu0 0.0
    %1173 = vmatpush1.msra.mxu0 0.0
    %1174 = vmatprep.subr.mxu0 0.0
    %1175 = vmatpush1.msra.mxu0 0.0
    %1176 = vmatprep.subr.mxu0 0.0
    %1177 = vmatpush1.msra.mxu0 0.0
    %1178 = vmatprep.subr.mxu0 0.0
    %1179 = vmatpush1.msra.mxu0 0.0
    %1180 = vmatprep.subr.mxu0 0.0
    %1181 = vmatpush1.msra.mxu0 0.0
    %1182 = vmatprep.subr.mxu0 0.0
    %1183 = vmatpush1.msra.mxu0 0.0
    %1184 = vmatprep.subr.mxu0 0.0
    %1185 = vmatpush1.msra.mxu0 0.0
    %1186 = vmatprep.subr.mxu0 0.0
    %1187 = vmatpush1.msra.mxu0 0.0
    %1188 = vmatprep.subr.mxu0 0.0
    %1189 = vmatpush1.msra.mxu0 0.0
    %1190 = vmatprep.subr.mxu0 0.0
    %1191 = vmatpush1.msra.mxu0 0.0
    %1192 = vmatprep.subr.mxu0 0.0
    %1193 = vmatpush1.msra.mxu0 0.0
    %1194 = vmatprep.mubr.f32.mxu0 0.0
    %1195 = vmatmul.mubr.f32.gmra.mrb[0].mxu0 %v1107
    %v1196 = vpop.f32.mrb[0].mxu0
    %v1197 = vadd.f32 %v1097, %v1196
    %v1198 = vpop.f32.mrb[0].mxu0
    %1199 = vmatprep.mubr.f32.mxu0 0.0
    %1200 = vmatmul.mubr.f32.gmra.mrb[0].mxu0 %v1110
    %v1201 = vpop.f32.mrb[0].mxu0
    %v1202 = vadd.f32 %v1097, %v1201
    %v1203 = vpop.f32.mrb[0].mxu0
    %1204 = vmatprep.mubr.f32.mxu0 0.0
    %1205 = vmatmul.mubr.f32.gmra.mrb[0].mxu0 %v1113
    %v1206 = vpop.f32.mrb[0].mxu0
    %v1207 = vadd.f32 %v1097, %v1206
    %v1208 = vpop.f32.mrb[0].mxu0
    %1209 = vmatprep.mubr.f32.mxu0 0.0
    %1210 = vmatmul.mubr.f32.gmra.mrb[0].mxu0 %v1116
    %v1211 = vpop.f32.mrb[0].mxu0
    %v1212 = vadd.f32 %v1097, %v1211
    %v1213 = vpop.f32.mrb[0].mxu0
    %1214 = vmatprep.mubr.f32.mxu0 0.0
    %1215 = vmatmul.mubr.f32.gmra.mrb[0].mxu0 %v1119
    %v1216 = vpop.f32.mrb[0].mxu0
    %v1217 = vadd.f32 %v1097, %v1216
    %v1218 = vpop.f32.mrb[0].mxu0
    %1219 = vmatprep.mubr.f32.mxu0 0.0
    %1220 = vmatmul.mubr.f32.gmra.mrb[0].mxu0 %v1122
    %v1221 = vpop.f32.mrb[0].mxu0
    %v1222 = vadd.f32 %v1097, %v1221
    %v1223 = vpop.f32.mrb[0].mxu0
    %1224 = vmatprep.mubr.f32.mxu0 0.0
    %1225 = vmatmul.mubr.f32.gmra.mrb[0].mxu0 %v1125
    %v1226 = vpop.f32.mrb[0].mxu0
    %v1227 = vadd.f32 %v1097, %v1226
    %v1228 = vpop.f32.mrb[0].mxu0
    %1229 = vmatprep.mubr.f32.mxu0 0.0
    %1230 = vmatmul.mubr.f32.gmra.mrb[0].mxu0 %v1128
    %v1231 = vpop.f32.mrb[0].mxu0
    %v1232 = vadd.f32 %v1097, %v1231
    %v1233 = vpop.f32.mrb[0].mxu0
    %1234 = vdwg.mxu0
    %1235 = vst [vmem:[#allocation7] sm:$0xff] %v1197
    %1236 = vst [vmem:[#allocation7 + $0x8] sm:$0xff] %v1202
    %1237 = vst [vmem:[#allocation7 + $0x10] sm:$0xff] %v1207
    %1238 = vst [vmem:[#allocation7 + $0x18] sm:$0xff] %v1212
    %1239 = vst [vmem:[#allocation7 + $0x20] sm:$0xff] %v1217
    %1240 = vst [vmem:[#allocation7 + $0x28] sm:$0xff] %v1222
    %1241 = vst [vmem:[#allocation7 + $0x30] sm:$0xff] %v1227
    %1242 = vst [vmem:[#allocation7 + $0x38] sm:$0xff] %v1232
    // Predicated region
    $region14: #{tpu_custom_call.1} parent=1 // pred_check
      _
    $region15: #{tpu_custom_call.1} parent=1 // pred_check_branch
      %1244 = sbr.rel (0) target = $region17
    $region16: #{tpu_custom_call.1} parent=1 // pred_region
      %s1246 = ssub.s32 1024, 1024
      %1247 = vsyncadd [#allocation6], %s1246
      %s1248 = sshll.u32 [#allocation7], 4
      %s1249 = int_to_ptr.vmem [resolvable:$true] %s1248
      %1254 = dma.vmem_to_hbm [thread:$0]  %s1249, 1024, %s2, [#allocation6], 128, 128, 8
    $region17: #{tpu_custom_call.1} parent=1 // pred_fallthru
      _
    // Predicated region
    $region18: #{tpu_custom_call.1} parent=1 // pred_check
      _
    $region19: #{tpu_custom_call.1} parent=1 // pred_check_branch
      %1256 = sbr.rel (0) target = $region21
    $region20: #{tpu_custom_call.1} parent=1 // pred_region
      %1257 = dma.done [#allocation6], 1024
    $region21: #{tpu_custom_call.1} parent=1 // pred_fallthru
      _
    %1258 = vsyncpa [#allocation5], 1
    %1259 = vsyncpa [#allocation6], 1

</llo_original>
